<compile_context>
chip_gen: v6e
topology: v6e:2x2x1
jax: 0.10.0
libtpu: 0.0.40
codegen_flags: <defaults>
</compile_context>

<pallas_src>
import jax
import jax.numpy as jnp
from jax.experimental import pallas as pl
from jax.experimental.pallas import tpu as pltpu

# Deterministic TTFS timing parameters (normally produced by set_params()).
T_MIN = 1.0        # end of the input spike window for this layer
T_MAX_1 = 3.0      # conv_first t_max
T_MAX_2 = 3.0      # conv_second t_max
T_MAX_SUB = 4.0    # sub layer t_max (= sub t_min + 1, as in set_params)


def _fold_params(kernels, biases):
    """Exactly the parameter construction of SpikingConv2D_Htanh.__init__."""
    kernels_pos = jnp.concatenate((kernels, -kernels), axis=1)         # (F, 2Cb, KH, KW)
    kernels_neg = jnp.concatenate((-kernels, kernels), axis=1)
    kernels_new = jnp.concatenate((kernels_pos, kernels_neg), axis=0)  # (2F, 2Cb, KH, KW)
    biases_new = jnp.concatenate((biases, -biases))                    # (2F,)
    w_taps = jnp.transpose(kernels_new, (2, 3, 1, 0))                  # (KH, KW, Cin, Cout)
    return w_taps, biases_new


def _pad_same(u_nhwc, KH, KW):
    ph, pw = (KH - 1) // 2, (KW - 1) // 2
    return jnp.pad(u_nhwc, ((0, 0), (ph, KH - 1 - ph), (pw, KW - 1 - pw), (0, 0)))


def _pick_row_tile(H, W):
    """Row-tile height: divides H, TILE_H*W is a multiple of 128 (lane-dense
    output block), targeting >=512 output pixels per step when possible."""
    cands = [th for th in range(1, H + 1) if H % th == 0 and (th * W) % 128 == 0]
    if not cands:
        return H                       # whole image: block == full dim is legal
    for th in cands:                   # smallest tile with >= 512 output pixels
        if th * W >= 512:
            return th
    return cands[0]                    # else smallest lane-aligned tile


def _make_kernel(TH, W, KH, KW, Cin, Cout):
    n_taps = KH * KW

    def kernel(x_ref, w_ref, b_ref, o_ref):
        # x_ref: (1, 1, TH+KH-1, W+KW-1, Cin) bf16  row-halo value-domain tile
        # w_ref: (KH*KW, Cin, Cout)            bf16  conv taps (VMEM resident)
        # b_ref: (Cout, 1)                     f32   conv_first bias
        # o_ref: (1, Cout, TH*W)               f32   output spike times
        x = x_ref[0, 0]                                   # (TH+KH-1, W+KW-1, Cin)
        acc = jnp.zeros((TH * W, Cout), jnp.float32)
        for t in range(n_taps):                           # unrolled at trace time
            dh, dw = divmod(t, KW)
            patch = x[dh:dh + TH, dw:dw + W, :].reshape(TH * W, Cin)
            acc = acc + jnp.dot(patch, w_ref[t],
                                preferred_element_type=jnp.float32)
        # Transpose once (XLU) so the epilogue runs on a lane-dense (Cout, TH*W)
        # tile and the store is unmasked / full-lane.
        y = acc.T + b_ref[...]                            # conv_first pre-activation
        # conv_first / conv_second / SubSNNLayer fold:
        #   ReLU(y) - ReLU(y - 1) == clip(y, 0, 1)
        o_ref[0] = (T_MAX_SUB - jnp.clip(y, 0.0, 1.0)).astype(o_ref.dtype)

    return kernel


@jax.jit
def spiking_conv2d_htanh(tj, kernels, biases):
    """Forward pass. tj: (N, Cin, H, W) spike times, NCHW (PyTorch convention)."""
    N, Cin, H, W = tj.shape
    F, Cb, KH, KW = kernels.shape
    Cout = 2 * F
    assert Cin == 2 * Cb, "input must be dual-rail (2 * base channels)"

    w_taps, biases_new = _fold_params(kernels, biases)
    wtap = w_taps.reshape(KH * KW, Cin, Cout).astype(jnp.bfloat16)
    b1 = biases_new.reshape(Cout, 1).astype(jnp.float32)

    # value-domain encode, NHWC, 'same' zero pad, bf16
    u = jnp.transpose(T_MIN - tj, (0, 2, 3, 1)).astype(jnp.bfloat16)
    u_pad = _pad_same(u, KH, KW)                          # (N, H+KH-1, W+KW-1, Cin)

    TH = _pick_row_tile(H, W)
    R = H // TH
    Hh = TH + KH - 1
    Wp = W + KW - 1
    # Row-halo tiles: ~(TH+KH-1)/TH x input bytes instead of the KH*KW x im2col
    # blow-up; lets BlockSpec auto-pipeline non-overlapping blocks.
    x_halo = jnp.stack([u_pad[:, r * TH:r * TH + Hh] for r in range(R)], axis=1)
    # x_halo: (N, R, Hh, Wp, Cin)

    out = pl.pallas_call(
        _make_kernel(TH, W, KH, KW, Cin, Cout),
        out_shape=jax.ShapeDtypeStruct((N, Cout, H * W), jnp.float32),
        grid_spec=pltpu.PrefetchScalarGridSpec(
            num_scalar_prefetch=0,
            grid=(N, R),
            in_specs=[
                pl.BlockSpec((1, 1, Hh, Wp, Cin), lambda n, r: (n, r, 0, 0, 0)),
                pl.BlockSpec((KH * KW, Cin, Cout), lambda n, r: (0, 0, 0)),
                pl.BlockSpec((Cout, 1), lambda n, r: (0, 0)),
            ],
            out_specs=pl.BlockSpec((1, Cout, TH * W), lambda n, r: (n, 0, r)),
        ),
        compiler_params=pltpu.CompilerParams(
            dimension_semantics=("parallel", "parallel")),
    )(x_halo, wtap, b1)

    # Already channel-major: just reshape to NCHW, no transpose needed.
    return out.reshape(N, Cout, H, W)


def _reference(tj, kernels, biases):
    """Pure-JAX reference with the original *unfused* two-branch module math
    (conv_first, conv_second, SubSNNLayer), on the same bf16-rounded operands
    the kernel consumes, so the comparison isolates the Pallas implementation."""
    N, Cin, H, W = tj.shape
    F, Cb, KH, KW = kernels.shape
    Cout = 2 * F
    w_taps, biases_new = _fold_params(kernels, biases)
    w = w_taps.astype(jnp.bfloat16).astype(jnp.float32)               # (KH,KW,Cin,Cout)
    u = jnp.transpose(T_MIN - tj, (0, 2, 3, 1)).astype(jnp.bfloat16).astype(jnp.float32)
    u_pad = _pad_same(u, KH, KW)
    a = jnp.zeros((N, H, W, Cout), jnp.float32)
    for dh in range(KH):
        for dw in range(KW):
            a = a + jnp.einsum("nhwc,co->nhwo",
                               u_pad[:, dh:dh + H, dw:dw + W, :], w[dh, dw])
    b1 = biases_new.astype(jnp.float32)
    t1 = T_MAX_1 - jnp.maximum(a + b1, 0.0)          # conv_first
    t2 = T_MAX_2 - jnp.maximum(a + b1 - 1.0, 0.0)    # conv_second (bias - 1)
    out = T_MAX_SUB - ((T_MAX_1 - t1) - (T_MAX_2 - t2))   # SubSNNLayer
    return jnp.transpose(out, (0, 3, 1, 2))


if __name__ == "__main__":
    key = jax.random.PRNGKey(0)
    k1, k2, k3 = jax.random.split(key, 3)

    N, Cb, H, W, F = 2, 2, 16, 16, 4          # dual-rail input channels = 2*Cb = 4
    kernels = 0.5 * jax.random.normal(k1, (F, Cb, 3, 3), jnp.float32)   # base kernels
    biases = 0.1 * jax.random.normal(k2, (F,), jnp.float32)             # base biases
    # input spike times in [0, T_MIN]
    tj = jax.random.uniform(k3, (N, 2 * Cb, H, W), jnp.float32,
                            minval=0.0, maxval=T_MIN)

    out = jax.block_until_ready(spiking_conv2d_htanh(tj, kernels, biases))
    ref = jax.block_until_ready(_reference(tj, kernels, biases))

    assert out.shape == (N, 2 * F, H, W), out.shape
    assert jnp.allclose(out, ref, atol=5e-3, rtol=5e-3), (
        "mismatch vs reference, max abs err = %f"
        % float(jnp.max(jnp.abs(out - ref))))
    print("KERNEL_OK")
</pallas_src>

<mosaic_0001>
module attributes {stable_mosaic.version = 11 : i64} {
  func.func @kernel(%arg0: i32, %arg1: i32, %arg2: memref<1x1x10x18x4xbf16, #tpu.memory_space<vmem>>, %arg3: memref<9x4x8xbf16, #tpu.memory_space<vmem>>, %arg4: memref<8x1xf32, #tpu.memory_space<vmem>>, %arg5: memref<1x8x128xf32, #tpu.memory_space<vmem>>) attributes {dimension_semantics = [#tpu.dimension_semantics<parallel>, #tpu.dimension_semantics<parallel>], iteration_bounds = array<i64: 2, 2>, scalar_prefetch = 0 : i64, scratch_operands = 0 : i64, tpu.core_type = #tpu.core_type<tc>, window_params = [{transform_indices = @transform_0, window_bounds = array<i64: 1, 1, 10, 18, 4>}, {pipeline_mode = #tpu.pipeline_mode<synchronous>, transform_indices = @transform_1, window_bounds = array<i64: 9, 4, 8>}, {pipeline_mode = #tpu.pipeline_mode<synchronous>, transform_indices = @transform_2, window_bounds = array<i64: 8, 1>}, {transform_indices = @transform_3, window_bounds = array<i64: 1, 8, 128>}]} {
    %c0 = arith.constant 0 : index
    %c0_0 = arith.constant 0 : index
    %c0_1 = arith.constant 0 : index
    %c0_2 = arith.constant 0 : index
    %c0_3 = arith.constant 0 : index
    %0 = vector.load %arg2[%c0, %c0_0, %c0_1, %c0_2, %c0_3] : memref<1x1x10x18x4xbf16, #tpu.memory_space<vmem>>, vector<1x1x10x18x4xbf16>
    %1 = vector.shape_cast %0 : vector<1x1x10x18x4xbf16> to vector<10x18x4xbf16>
    %cst = arith.constant 0.000000e+00 : f32
    %2 = vector.broadcast %cst : f32 to vector<128x8xf32>
    %3 = vector.extract_strided_slice %1 {offsets = [0, 0, 0], sizes = [8, 16, 4], strides = [1, 1, 1]} : vector<10x18x4xbf16> to vector<8x16x4xbf16>
    %4 = vector.shape_cast %3 : vector<8x16x4xbf16> to vector<128x4xbf16>
    %c0_4 = arith.constant 0 : index
    %c0_5 = arith.constant 0 : index
    %c0_6 = arith.constant 0 : index
    %5 = vector.load %arg3[%c0_4, %c0_5, %c0_6] : memref<9x4x8xbf16, #tpu.memory_space<vmem>>, vector<1x4x8xbf16>
    %6 = vector.shape_cast %5 : vector<1x4x8xbf16> to vector<4x8xbf16>
    %cst_7 = arith.constant dense<0.000000e+00> : vector<128x8xf32>
    %7 = tpu.matmul %4, %6, %cst_7 {dimension_numbers = #tpu.dot_dimension_numbers<[1], [0], [0], [1], [0, 0, 1, 1], [], []>} : vector<128x4xbf16>, vector<4x8xbf16>, vector<128x8xf32> -> vector<128x8xf32>
    %8 = arith.addf %2, %7 : vector<128x8xf32>
    %9 = vector.extract_strided_slice %1 {offsets = [0, 1, 0], sizes = [8, 16, 4], strides = [1, 1, 1]} : vector<10x18x4xbf16> to vector<8x16x4xbf16>
    %10 = vector.shape_cast %9 : vector<8x16x4xbf16> to vector<128x4xbf16>
    %c1 = arith.constant 1 : index
    %c0_8 = arith.constant 0 : index
    %c0_9 = arith.constant 0 : index
    %11 = vector.load %arg3[%c1, %c0_8, %c0_9] : memref<9x4x8xbf16, #tpu.memory_space<vmem>>, vector<1x4x8xbf16>
    %12 = vector.shape_cast %11 : vector<1x4x8xbf16> to vector<4x8xbf16>
    %cst_10 = arith.constant dense<0.000000e+00> : vector<128x8xf32>
    %13 = tpu.matmul %10, %12, %cst_10 {dimension_numbers = #tpu.dot_dimension_numbers<[1], [0], [0], [1], [0, 0, 1, 1], [], []>} : vector<128x4xbf16>, vector<4x8xbf16>, vector<128x8xf32> -> vector<128x8xf32>
    %14 = arith.addf %8, %13 : vector<128x8xf32>
    %15 = vector.extract_strided_slice %1 {offsets = [0, 2, 0], sizes = [8, 16, 4], strides = [1, 1, 1]} : vector<10x18x4xbf16> to vector<8x16x4xbf16>
    %16 = vector.shape_cast %15 : vector<8x16x4xbf16> to vector<128x4xbf16>
    %c2 = arith.constant 2 : index
    %c0_11 = arith.constant 0 : index
    %c0_12 = arith.constant 0 : index
    %17 = vector.load %arg3[%c2, %c0_11, %c0_12] : memref<9x4x8xbf16, #tpu.memory_space<vmem>>, vector<1x4x8xbf16>
    %18 = vector.shape_cast %17 : vector<1x4x8xbf16> to vector<4x8xbf16>
    %cst_13 = arith.constant dense<0.000000e+00> : vector<128x8xf32>
    %19 = tpu.matmul %16, %18, %cst_13 {dimension_numbers = #tpu.dot_dimension_numbers<[1], [0], [0], [1], [0, 0, 1, 1], [], []>} : vector<128x4xbf16>, vector<4x8xbf16>, vector<128x8xf32> -> vector<128x8xf32>
    %20 = arith.addf %14, %19 : vector<128x8xf32>
    %21 = vector.extract_strided_slice %1 {offsets = [1, 0, 0], sizes = [8, 16, 4], strides = [1, 1, 1]} : vector<10x18x4xbf16> to vector<8x16x4xbf16>
    %22 = vector.shape_cast %21 : vector<8x16x4xbf16> to vector<128x4xbf16>
    %c3 = arith.constant 3 : index
    %c0_14 = arith.constant 0 : index
    %c0_15 = arith.constant 0 : index
    %23 = vector.load %arg3[%c3, %c0_14, %c0_15] : memref<9x4x8xbf16, #tpu.memory_space<vmem>>, vector<1x4x8xbf16>
    %24 = vector.shape_cast %23 : vector<1x4x8xbf16> to vector<4x8xbf16>
    %cst_16 = arith.constant dense<0.000000e+00> : vector<128x8xf32>
    %25 = tpu.matmul %22, %24, %cst_16 {dimension_numbers = #tpu.dot_dimension_numbers<[1], [0], [0], [1], [0, 0, 1, 1], [], []>} : vector<128x4xbf16>, vector<4x8xbf16>, vector<128x8xf32> -> vector<128x8xf32>
    %26 = arith.addf %20, %25 : vector<128x8xf32>
    %27 = vector.extract_strided_slice %1 {offsets = [1, 1, 0], sizes = [8, 16, 4], strides = [1, 1, 1]} : vector<10x18x4xbf16> to vector<8x16x4xbf16>
    %28 = vector.shape_cast %27 : vector<8x16x4xbf16> to vector<128x4xbf16>
    %c4 = arith.constant 4 : index
    %c0_17 = arith.constant 0 : index
    %c0_18 = arith.constant 0 : index
    %29 = vector.load %arg3[%c4, %c0_17, %c0_18] : memref<9x4x8xbf16, #tpu.memory_space<vmem>>, vector<1x4x8xbf16>
    %30 = vector.shape_cast %29 : vector<1x4x8xbf16> to vector<4x8xbf16>
    %cst_19 = arith.constant dense<0.000000e+00> : vector<128x8xf32>
    %31 = tpu.matmul %28, %30, %cst_19 {dimension_numbers = #tpu.dot_dimension_numbers<[1], [0], [0], [1], [0, 0, 1, 1], [], []>} : vector<128x4xbf16>, vector<4x8xbf16>, vector<128x8xf32> -> vector<128x8xf32>
    %32 = arith.addf %26, %31 : vector<128x8xf32>
    %33 = vector.extract_strided_slice %1 {offsets = [1, 2, 0], sizes = [8, 16, 4], strides = [1, 1, 1]} : vector<10x18x4xbf16> to vector<8x16x4xbf16>
    %34 = vector.shape_cast %33 : vector<8x16x4xbf16> to vector<128x4xbf16>
    %c5 = arith.constant 5 : index
    %c0_20 = arith.constant 0 : index
    %c0_21 = arith.constant 0 : index
    %35 = vector.load %arg3[%c5, %c0_20, %c0_21] : memref<9x4x8xbf16, #tpu.memory_space<vmem>>, vector<1x4x8xbf16>
    %36 = vector.shape_cast %35 : vector<1x4x8xbf16> to vector<4x8xbf16>
    %cst_22 = arith.constant dense<0.000000e+00> : vector<128x8xf32>
    %37 = tpu.matmul %34, %36, %cst_22 {dimension_numbers = #tpu.dot_dimension_numbers<[1], [0], [0], [1], [0, 0, 1, 1], [], []>} : vector<128x4xbf16>, vector<4x8xbf16>, vector<128x8xf32> -> vector<128x8xf32>
    %38 = arith.addf %32, %37 : vector<128x8xf32>
    %39 = vector.extract_strided_slice %1 {offsets = [2, 0, 0], sizes = [8, 16, 4], strides = [1, 1, 1]} : vector<10x18x4xbf16> to vector<8x16x4xbf16>
    %40 = vector.shape_cast %39 : vector<8x16x4xbf16> to vector<128x4xbf16>
    %c6 = arith.constant 6 : index
    %c0_23 = arith.constant 0 : index
    %c0_24 = arith.constant 0 : index
    %41 = vector.load %arg3[%c6, %c0_23, %c0_24] : memref<9x4x8xbf16, #tpu.memory_space<vmem>>, vector<1x4x8xbf16>
    %42 = vector.shape_cast %41 : vector<1x4x8xbf16> to vector<4x8xbf16>
    %cst_25 = arith.constant dense<0.000000e+00> : vector<128x8xf32>
    %43 = tpu.matmul %40, %42, %cst_25 {dimension_numbers = #tpu.dot_dimension_numbers<[1], [0], [0], [1], [0, 0, 1, 1], [], []>} : vector<128x4xbf16>, vector<4x8xbf16>, vector<128x8xf32> -> vector<128x8xf32>
    %44 = arith.addf %38, %43 : vector<128x8xf32>
    %45 = vector.extract_strided_slice %1 {offsets = [2, 1, 0], sizes = [8, 16, 4], strides = [1, 1, 1]} : vector<10x18x4xbf16> to vector<8x16x4xbf16>
    %46 = vector.shape_cast %45 : vector<8x16x4xbf16> to vector<128x4xbf16>
    %c7 = arith.constant 7 : index
    %c0_26 = arith.constant 0 : index
    %c0_27 = arith.constant 0 : index
    %47 = vector.load %arg3[%c7, %c0_26, %c0_27] : memref<9x4x8xbf16, #tpu.memory_space<vmem>>, vector<1x4x8xbf16>
    %48 = vector.shape_cast %47 : vector<1x4x8xbf16> to vector<4x8xbf16>
    %cst_28 = arith.constant dense<0.000000e+00> : vector<128x8xf32>
    %49 = tpu.matmul %46, %48, %cst_28 {dimension_numbers = #tpu.dot_dimension_numbers<[1], [0], [0], [1], [0, 0, 1, 1], [], []>} : vector<128x4xbf16>, vector<4x8xbf16>, vector<128x8xf32> -> vector<128x8xf32>
    %50 = arith.addf %44, %49 : vector<128x8xf32>
    %51 = vector.extract_strided_slice %1 {offsets = [2, 2, 0], sizes = [8, 16, 4], strides = [1, 1, 1]} : vector<10x18x4xbf16> to vector<8x16x4xbf16>
    %52 = vector.shape_cast %51 : vector<8x16x4xbf16> to vector<128x4xbf16>
    %c8 = arith.constant 8 : index
    %c0_29 = arith.constant 0 : index
    %c0_30 = arith.constant 0 : index
    %53 = vector.load %arg3[%c8, %c0_29, %c0_30] : memref<9x4x8xbf16, #tpu.memory_space<vmem>>, vector<1x4x8xbf16>
    %54 = vector.shape_cast %53 : vector<1x4x8xbf16> to vector<4x8xbf16>
    %cst_31 = arith.constant dense<0.000000e+00> : vector<128x8xf32>
    %55 = tpu.matmul %52, %54, %cst_31 {dimension_numbers = #tpu.dot_dimension_numbers<[1], [0], [0], [1], [0, 0, 1, 1], [], []>} : vector<128x4xbf16>, vector<4x8xbf16>, vector<128x8xf32> -> vector<128x8xf32>
    %56 = arith.addf %50, %55 : vector<128x8xf32>
    %57 = tpu.transpose %56, [1, 0] : vector<128x8xf32> -> vector<8x128xf32>
    %c0_32 = arith.constant 0 : index
    %c0_33 = arith.constant 0 : index
    %58 = vector.load %arg4[%c0_32, %c0_33] : memref<8x1xf32, #tpu.memory_space<vmem>>, vector<8x1xf32>
    %59 = vector.broadcast %58 : vector<8x1xf32> to vector<8x128xf32>
    %60 = arith.addf %57, %59 : vector<8x128xf32>
    %cst_34 = arith.constant 0.000000e+00 : f32
    %cst_35 = arith.constant 1.000000e+00 : f32
    %61 = vector.broadcast %cst_34 : f32 to vector<8x128xf32>
    %62 = arith.maximumf %61, %60 : vector<8x128xf32>
    %63 = vector.broadcast %cst_35 : f32 to vector<8x128xf32>
    %64 = arith.minimumf %63, %62 : vector<8x128xf32>
    %cst_36 = arith.constant 4.000000e+00 : f32
    %65 = vector.broadcast %cst_36 : f32 to vector<8x128xf32>
    %66 = arith.subf %65, %64 : vector<8x128xf32>
    %c0_37 = arith.constant 0 : index
    %c0_38 = arith.constant 0 : index
    %c0_39 = arith.constant 0 : index
    %67 = vector.load %arg5[%c0_37, %c0_38, %c0_39] : memref<1x8x128xf32, #tpu.memory_space<vmem>>, vector<1x8x128xf32>
    %68 = vector.shape_cast %67 : vector<1x8x128xf32> to vector<8x128xf32>
    %69 = vector.shape_cast %66 : vector<8x128xf32> to vector<1x8x128xf32>
    tpu.vector_store %arg5[%c0_37, %c0_38, %c0_39], %69 {strides = array<i32>} : memref<1x8x128xf32, #tpu.memory_space<vmem>>, vector<1x8x128xf32>,
    return
  }
  func.func @transform_0(%arg0: i32, %arg1: i32) -> (i32, i32, i32, i32, i32) {
    %c0_i32 = arith.constant 0 : i32
    %c0_i32_0 = arith.constant 0 : i32
    %c0_i32_1 = arith.constant 0 : i32
    %c0_i32_2 = arith.constant 0 : i32
    return %arg0, %arg1, %c0_i32, %c0_i32_0, %c0_i32_1 : i32, i32, i32, i32, i32
  }
  func.func @transform_1(%arg0: i32, %arg1: i32) -> (i32, i32, i32) {
    %c0_i32 = arith.constant 0 : i32
    %c0_i32_0 = arith.constant 0 : i32
    %c0_i32_1 = arith.constant 0 : i32
    %c0_i32_2 = arith.constant 0 : i32
    return %c0_i32, %c0_i32_0, %c0_i32_1 : i32, i32, i32
  }
  func.func @transform_2(%arg0: i32, %arg1: i32) -> (i32, i32) {
    %c0_i32 = arith.constant 0 : i32
    %c0_i32_0 = arith.constant 0 : i32
    %c0_i32_1 = arith.constant 0 : i32
    return %c0_i32, %c0_i32_0 : i32, i32
  }
  func.func @transform_3(%arg0: i32, %arg1: i32) -> (i32, i32, i32) {
    %c0_i32 = arith.constant 0 : i32
    %c0_i32_0 = arith.constant 0 : i32
    return %arg0, %c0_i32, %arg1 : i32, i32, i32
  }
}

</mosaic_0001>

<llo_original>
// kernel: neg.5
$region0: #{neg.5}
  #allocation0 [shape = 's32[1]{0}', space=sflag, size = 0x4, scoped, tag = 'scoped memory for neg.5']
  %s0 = inlined_call_operand.vmem [shape: f32[4], index: 0, kind: input, shape index: {}]
  %s1 = inlined_call_operand.vmem [shape: f32[4], index: 1, kind: output, shape index: {}]
  %v2 = vld [vmem:[%s0] sm:$0x1]
  %3 = xla_tuple %v2
  %4 = xla_tuple %3
  %v5 = vxor.u32 %v2, 2147483648
  %6 = xla_tuple %v5
  %7 = vst [vmem:[%s1] sm:$0x1] %v5

// kernel: spiking_conv2d_htanh.1
$region0: #{spiking_conv2d_htanh.1}
  #allocation0 [shape = 'u32[]', space=smem, size = 0x4, offset = 0x4, fixed_abs, tag = 'smem constant byte address 0x4 - core index']
  #allocation1 [shape = 'u32[144,128]{1,0:T(1,128)}', space=vmem, size = 0x12000, scoped, tag = 'internal scratch']
  %s0 = inlined_call_operand.vmem [shape: bf16[2,2,10,18,4], index: 0, kind: input, shape index: {}]
  %s1 = inlined_call_operand.vmem [shape: bf16[9,4,8], index: 1, kind: input, shape index: {}]
  %s2 = inlined_call_operand.vmem [shape: f32[8,1], index: 2, kind: input, shape index: {}]
  %s3 = inlined_call_operand.vmem [shape: f32[2,8,256], index: 3, kind: output, shape index: {}]
  %s4 = sld [smem:[#allocation0]]
  $region45: #{spiking_conv2d_htanh.1} parent=0
    _
  %s6 = ssub.s32 1, %s4
  %s7 = scalar_select 0, %s6, %s4
  loop: start=0, step=1, limit=6
  $region2: #{spiking_conv2d_htanh.1} parent=0 // loop_pre_header
    _
  $region3: #{spiking_conv2d_htanh.1} parent=0 // loop_header
    %s9 = sphi 0, %s13
    %p10 = scmp.ge.s32.totalorder %s9, 6
    %s16 = sphi 0, %s28
    %s17 = sphi 0, %s24
    %s18 = sphi 0, %s16
    %s19 = sphi 0, %s17
    %s20 = sphi 0, %s18
    %s21 = sphi 0, %s19
    %s33 = sphi 0, %s35
    %s36 = sphi 0, %s33
    %s37 = sphi 0, %s36
    %s53 = sphi 0, %s37
    %s57 = sphi 0, %s57
    %s59 = sphi 0, %s57
    %s60 = sphi 0, %s59
    %s74 = sphi 0, %s60
    %s78 = sphi 0, %s78
    %s80 = sphi 0, %s78
    %s81 = sphi 0, %s80
    %s95 = sphi 0, %s81
    %s103 = sphi 0, %s105
    %s106 = sphi 0, %s103
    %s107 = sphi 0, %s106
    %s123 = sphi 0, %s107
  $region4: #{spiking_conv2d_htanh.1} parent=0 // loop_header_branch
    %12 = sbr.rel (%p10) target = $region8
  $region5: #{spiking_conv2d_htanh.1} parent=0 // loop_body
    %s14 = ssub.s32 %s9, 1
    %s15 = ssub.s32 %s9, 2
    %s22 = sadd.s32 1, %s17
    %p23 = scmp.ge.s32.totalorder %s22, 2
    %s24 = scalar_select %p23, 0, %s22
    %s25 = sadd.s32 1, %s16
    %s26 = scalar_select %p23, %s25, %s16
    %p27 = scmp.ge.s32.totalorder %s26, 2
    %s28 = scalar_select %p27, 0, %s26
    %s29 = ssub.s32 %s16, %s28
    %s30 = ssub.s32 %s17, %s24
    %s31 = sor.u32 %s29, %s30
    %p32 = scmp.eq.s32.totalorder %s31, 0
    %s34 = sadd.s32 %s33, 1
    %s35 = scalar_select %p32, %s33, %s34
    %p38 = pneg %p32
    %p39 = scmp.eq.s32.totalorder %s9, 3
    %p40 = por %p38, %p39
    %p41 = scmp.ne.s32.totalorder %s33, %s36
    %p42 = scmp.eq.s32.totalorder %s9, 0
    %p43 = por %p41, %p42
    %p44 = scmp.ne.s32.totalorder %s33, %s36
    %p45 = scmp.eq.s32.totalorder %s14, 3
    %p46 = por %p44, %p45
    %p47 = scmp.ne.s32.totalorder %s36, %s37
    %p48 = scmp.eq.s32.totalorder %s14, 0
    %p49 = por %p47, %p48
    %p50 = scmp.ne.s32.totalorder %s36, %s37
    %p51 = scmp.eq.s32.totalorder %s15, 3
    %p52 = por %p50, %p51
    %p54 = scmp.ne.s32.totalorder %s37, %s53
    %p55 = scmp.eq.s32.totalorder %s15, 0
    %p56 = por %p54, %p55
    %s58 = sadd.s32 %s57, 1
    %p61 = scmp.eq.s32.totalorder %s9, 3
    %p62 = scmp.ne.s32.totalorder %s57, %s59
    %p63 = scmp.eq.s32.totalorder %s9, 0
    %p64 = por %p62, %p63
    %p65 = scmp.ne.s32.totalorder %s57, %s59
    %p66 = scmp.eq.s32.totalorder %s14, 3
    %p67 = por %p65, %p66
    %p68 = scmp.ne.s32.totalorder %s59, %s60
    %p69 = scmp.eq.s32.totalorder %s14, 0
    %p70 = por %p68, %p69
    %p71 = scmp.ne.s32.totalorder %s59, %s60
    %p72 = scmp.eq.s32.totalorder %s15, 3
    %p73 = por %p71, %p72
    %p75 = scmp.ne.s32.totalorder %s60, %s74
    %p76 = scmp.eq.s32.totalorder %s15, 0
    %p77 = por %p75, %p76
    %s79 = sadd.s32 %s78, 1
    %p82 = scmp.eq.s32.totalorder %s9, 3
    %p83 = scmp.ne.s32.totalorder %s78, %s80
    %p84 = scmp.eq.s32.totalorder %s9, 0
    %p85 = por %p83, %p84
    %p86 = scmp.ne.s32.totalorder %s78, %s80
    %p87 = scmp.eq.s32.totalorder %s14, 3
    %p88 = por %p86, %p87
    %p89 = scmp.ne.s32.totalorder %s80, %s81
    %p90 = scmp.eq.s32.totalorder %s14, 0
    %p91 = por %p89, %p90
    %p92 = scmp.ne.s32.totalorder %s80, %s81
    %p93 = scmp.eq.s32.totalorder %s15, 3
    %p94 = por %p92, %p93
    %p96 = scmp.ne.s32.totalorder %s81, %s95
    %p97 = scmp.eq.s32.totalorder %s15, 0
    %p98 = por %p96, %p97
    %s99 = ssub.s32 %s16, %s28
    %s100 = ssub.s32 %s17, %s24
    %s101 = sor.u32 %s99, %s100
    %p102 = scmp.eq.s32.totalorder %s101, 0
    %s104 = sadd.s32 %s103, 1
    %s105 = scalar_select %p102, %s103, %s104
    %p108 = pneg %p102
    %p109 = scmp.eq.s32.totalorder %s9, 3
    %p110 = por %p108, %p109
    %p111 = scmp.ne.s32.totalorder %s103, %s106
    %p112 = scmp.eq.s32.totalorder %s9, 0
    %p113 = por %p111, %p112
    %p114 = scmp.ne.s32.totalorder %s103, %s106
    %p115 = scmp.eq.s32.totalorder %s14, 3
    %p116 = por %p114, %p115
    %p117 = scmp.ne.s32.totalorder %s106, %s107
    %p118 = scmp.eq.s32.totalorder %s14, 0
    %p119 = por %p117, %p118
    %p120 = scmp.ne.s32.totalorder %s106, %s107
    %p121 = scmp.eq.s32.totalorder %s15, 3
    %p122 = por %p120, %p121
    %p124 = scmp.ne.s32.totalorder %s107, %s123
    %p125 = scmp.eq.s32.totalorder %s15, 0
    %p126 = por %p124, %p125
    %p127 = scmp.le.s32.totalorder 1, %s9
    %p128 = scmp.lt.s32.totalorder %s9, 5
    %p129 = pnand %p127, %p128
    %p130 = pneg %p129
    // Predicated region
    $region9: #{spiking_conv2d_htanh.1} parent=5 // pred_check
      _
    $region10: #{spiking_conv2d_htanh.1} parent=5 // pred_check_branch
      %132 = sbr.rel (%p129) target = $region12
    $region11: #{spiking_conv2d_htanh.1} parent=5 // pred_region
      %s133 = ssub.s32 %s9, 1
      // Predicated region
      $region13: #{spiking_conv2d_htanh.1} parent=11 // pred_check
        %p134 = pneg %p70
      $region14: #{spiking_conv2d_htanh.1} parent=11 // pred_check_branch
        %136 = sbr.rel (%p134) target = $region16
      $region15: #{spiking_conv2d_htanh.1} parent=11 // pred_region
        _
      $region16: #{spiking_conv2d_htanh.1} parent=11 // pred_fallthru
        _
      // Predicated region
      $region17: #{spiking_conv2d_htanh.1} parent=11 // pred_check
        %p137 = pneg %p91
      $region18: #{spiking_conv2d_htanh.1} parent=11 // pred_check_branch
        %139 = sbr.rel (%p137) target = $region20
      $region19: #{spiking_conv2d_htanh.1} parent=11 // pred_region
        _
      $region20: #{spiking_conv2d_htanh.1} parent=11 // pred_fallthru
        _
    $region12: #{spiking_conv2d_htanh.1} parent=5 // pred_fallthru
      _
    %p140 = scmp.lt.s32.totalorder %s9, 4
    // Predicated region
    $region21: #{spiking_conv2d_htanh.1} parent=5 // pred_check
      %p141 = pneg %p140
    $region22: #{spiking_conv2d_htanh.1} parent=5 // pred_check_branch
      %143 = sbr.rel (%p141) target = $region24
    $region23: #{spiking_conv2d_htanh.1} parent=5 // pred_region
      // Predicated region
      $region25: #{spiking_conv2d_htanh.1} parent=23 // pred_check
        %p144 = pneg %p43
      $region26: #{spiking_conv2d_htanh.1} parent=23 // pred_check_branch
        %146 = sbr.rel (%p144) target = $region28
      $region27: #{spiking_conv2d_htanh.1} parent=23 // pred_region
        %p147 = scmp.lt.s32.totalorder %s16, 1
        %s148 = scalar_select %p147, %s16, 1
        %p149 = scmp.lt.s32.totalorder %s17, 1
        %s150 = scalar_select %p149, %s17, 1
        %s151 = smul.addr %s150, 30
        %s152 = smul.addr %s148, 60
        %s153 = sadd.s32 %s151, %s152
        %s154 = smul.addr %s153, 4
        %s155 = scalar_lea.vmem %s0, %s154
      $region28: #{spiking_conv2d_htanh.1} parent=23 // pred_fallthru
        _
    $region24: #{spiking_conv2d_htanh.1} parent=5 // pred_fallthru
      _
    %p156 = scmp.le.s32.totalorder 1, %s9
    %p157 = scmp.lt.s32.totalorder %s9, 5
    %p158 = pnand %p156, %p157
    %p159 = pneg %p158
    // Predicated region
    $region29: #{spiking_conv2d_htanh.1} parent=5 // pred_check
      _
    $region30: #{spiking_conv2d_htanh.1} parent=5 // pred_check_branch
      %161 = sbr.rel (%p158) target = $region32
    $region31: #{spiking_conv2d_htanh.1} parent=5 // pred_region
      %s162 = ssub.s32 %s9, 1
      %p163 = scmp.lt.s32.totalorder %s18, 1
      %s164 = scalar_select %p163, %s18, 1
      %p165 = scmp.lt.s32.totalorder %s19, 1
      %s166 = scalar_select %p165, %s19, 1
      %s167 = smul.addr %s166, 30
      %s168 = smul.addr %s164, 60
      %s169 = sadd.s32 %s167, %s168
      %s170 = smul.addr %s169, 4
      %s171 = scalar_lea.vmem %s0, %s170
      %p172 = pneg %p49
      %p173 = pneg %p46
      %p174 = pneg %p70
      %p175 = pneg %p67
      %p176 = pneg %p91
      %p177 = pneg %p88
      %p178 = pneg %p119
      %p179 = pneg %p116
      %p180 = scmp.lt.s32.totalorder %s18, 1
      %s181 = scalar_select %p180, %s18, 1
      %p182 = scmp.lt.s32.totalorder %s19, 1
      %s183 = scalar_select %p182, %s19, 1
      %s184 = smul.addr %s181, 2
      %s185 = sadd.s32 %s183, %s184
      %s186 = smul.addr %s185, 8
      %s187 = scalar_lea.vmem %s3, %s186
      %p188 = scmp.lt.s32.totalorder %s18, 1
      %s189 = scalar_select %p188, %s18, 1
      %p190 = scmp.lt.s32.totalorder %s19, 1
      %s191 = scalar_select %p190, %s19, 1
      %s192 = smul.addr %s191, 30
      %s193 = smul.addr %s189, 60
      %s194 = sadd.s32 %s192, %s193
      %s195 = smul.addr %s194, 4
      %s196 = scalar_lea.vmem %s0, %s195
      %p197 = scmp.lt.s32.totalorder %s18, 1
      %s198 = scalar_select %p197, %s18, 1
      %p199 = scmp.lt.s32.totalorder %s19, 1
      %s200 = scalar_select %p199, %s19, 1
      %s201 = smul.addr %s198, 2
      %s202 = sadd.s32 %s200, %s201
      %s203 = smul.addr %s202, 8
      %s204 = scalar_lea.vmem %s3, %s203
      %v206 = vld [vmem:[%s196] sm:$0xf]
      %v207 = vld [vmem:[%s196 + $0x4] sm:$0xf]
      %v208 = vld [vmem:[%s196 + $0x8] sm:$0x1]
      %v209 = vld [vmem:[%s196 + $0xc] sm:$0xf]
      %v210 = vld [vmem:[%s196 + $0x10] sm:$0xf]
      %v211 = vld [vmem:[%s196 + $0x14] sm:$0x1]
      %v212 = vld [vmem:[%s196 + $0x18] sm:$0xf]
      %v213 = vld [vmem:[%s196 + $0x1c] sm:$0xf]
      %v214 = vld [vmem:[%s196 + $0x20] sm:$0x1]
      %v215 = vld [vmem:[%s196 + $0x24] sm:$0xf]
      %v216 = vld [vmem:[%s196 + $0x28] sm:$0xf]
      %v217 = vld [vmem:[%s196 + $0x2c] sm:$0x1]
      %v218 = vld [vmem:[%s196 + $0x30] sm:$0xf]
      %v219 = vld [vmem:[%s196 + $0x34] sm:$0xf]
      %v220 = vld [vmem:[%s196 + $0x38] sm:$0x1]
      %v221 = vld [vmem:[%s196 + $0x3c] sm:$0xf]
      %v222 = vld [vmem:[%s196 + $0x40] sm:$0xf]
      %v223 = vld [vmem:[%s196 + $0x44] sm:$0x1]
      %v224 = vld [vmem:[%s196 + $0x48] sm:$0xf]
      %v225 = vld [vmem:[%s196 + $0x4c] sm:$0xf]
      %v226 = vld [vmem:[%s196 + $0x50] sm:$0x1]
      %v227 = vld [vmem:[%s196 + $0x54] sm:$0xf]
      %v228 = vld [vmem:[%s196 + $0x58] sm:$0xf]
      %v229 = vld [vmem:[%s196 + $0x5c] sm:$0x1]
      %v230 = vld [vmem:[%s196 + $0x60] sm:$0xf]
      %v231 = vld [vmem:[%s196 + $0x64] sm:$0xf]
      %v232 = vld [vmem:[%s196 + $0x68] sm:$0x1]
      %v233 = vld [vmem:[%s196 + $0x6c] sm:$0xf]
      %v234 = vld [vmem:[%s196 + $0x70] sm:$0xf]
      %v235 = vld [vmem:[%s196 + $0x74] sm:$0x1]
      %v236 = vld [vmem:[%s1] sm:$0x3]
      %vm237 = vsmask.f32 3328
      %vm238 = vsmask.f32 7440
      %vm239 = vmor %vm237, %vm238
      %v241 = vshrl.u32 %v206, 16
      %v243 = vrot.slane %v241, 4
      %v244 = vshll.u32 %v206, 16
      %v246 = vrot.slane %v244, 5
      %v247 = vor.u32 %v243, %v246
      %v248 = vrot.slane %v247, 4
      %v250 = vshll.u32 %v207, 16
      %v252 = vrot.slane %v250, 5
      %v253 = vsel %vm239, %v248, %v252
      %v254 = vshrl.u32 %v207, 16
      %v256 = vrot.slane %v254, 4
      %v257 = vor.u32 %v256, %v252
      %v258 = vrot.slane %v257, 4
      %v260 = vshll.u32 %v208, 16
      %v262 = vrot.slane %v260, 5
      %v263 = vsel %vm239, %v258, %v262
      %v265 = vshrl.u32 %v209, 16
      %v267 = vrot.slane %v265, 4
      %v268 = vshll.u32 %v209, 16
      %v270 = vrot.slane %v268, 5
      %v271 = vor.u32 %v267, %v270
      %v272 = vrot.slane %v271, 4
      %v274 = vshll.u32 %v210, 16
      %v276 = vrot.slane %v274, 5
      %v277 = vsel %vm239, %v272, %v276
      %v278 = vshrl.u32 %v210, 16
      %v280 = vrot.slane %v278, 4
      %v281 = vor.u32 %v280, %v276
      %v282 = vrot.slane %v281, 4
      %v284 = vshll.u32 %v211, 16
      %v286 = vrot.slane %v284, 5
      %v287 = vsel %vm239, %v282, %v286
      %v289 = vshrl.u32 %v212, 16
      %v291 = vrot.slane %v289, 4
      %v292 = vshll.u32 %v212, 16
      %v294 = vrot.slane %v292, 5
      %v295 = vor.u32 %v291, %v294
      %v296 = vrot.slane %v295, 4
      %v298 = vshll.u32 %v213, 16
      %v300 = vrot.slane %v298, 5
      %v301 = vsel %vm239, %v296, %v300
      %v302 = vshrl.u32 %v213, 16
      %v304 = vrot.slane %v302, 4
      %v305 = vor.u32 %v304, %v300
      %v306 = vrot.slane %v305, 4
      %v308 = vshll.u32 %v214, 16
      %v310 = vrot.slane %v308, 5
      %v311 = vsel %vm239, %v306, %v310
      %v313 = vshrl.u32 %v215, 16
      %v315 = vrot.slane %v313, 4
      %v316 = vshll.u32 %v215, 16
      %v318 = vrot.slane %v316, 5
      %v319 = vor.u32 %v315, %v318
      %v320 = vrot.slane %v319, 4
      %v322 = vshll.u32 %v216, 16
      %v324 = vrot.slane %v322, 5
      %v325 = vsel %vm239, %v320, %v324
      %v326 = vshrl.u32 %v216, 16
      %v328 = vrot.slane %v326, 4
      %v329 = vor.u32 %v328, %v324
      %v330 = vrot.slane %v329, 4
      %v332 = vshll.u32 %v217, 16
      %v334 = vrot.slane %v332, 5
      %v335 = vsel %vm239, %v330, %v334
      %v337 = vshrl.u32 %v218, 16
      %v339 = vrot.slane %v337, 4
      %v340 = vshll.u32 %v218, 16
      %v342 = vrot.slane %v340, 5
      %v343 = vor.u32 %v339, %v342
      %v344 = vrot.slane %v343, 4
      %v346 = vshll.u32 %v219, 16
      %v348 = vrot.slane %v346, 5
      %v349 = vsel %vm239, %v344, %v348
      %v350 = vshrl.u32 %v219, 16
      %v352 = vrot.slane %v350, 4
      %v353 = vor.u32 %v352, %v348
      %v354 = vrot.slane %v353, 4
      %v356 = vshll.u32 %v220, 16
      %v358 = vrot.slane %v356, 5
      %v359 = vsel %vm239, %v354, %v358
      %v361 = vshrl.u32 %v221, 16
      %v363 = vrot.slane %v361, 4
      %v364 = vshll.u32 %v221, 16
      %v366 = vrot.slane %v364, 5
      %v367 = vor.u32 %v363, %v366
      %v368 = vrot.slane %v367, 4
      %v370 = vshll.u32 %v222, 16
      %v372 = vrot.slane %v370, 5
      %v373 = vsel %vm239, %v368, %v372
      %v374 = vshrl.u32 %v222, 16
      %v376 = vrot.slane %v374, 4
      %v377 = vor.u32 %v376, %v372
      %v378 = vrot.slane %v377, 4
      %v380 = vshll.u32 %v223, 16
      %v382 = vrot.slane %v380, 5
      %v383 = vsel %vm239, %v378, %v382
      %v385 = vshrl.u32 %v224, 16
      %v387 = vrot.slane %v385, 4
      %v388 = vshll.u32 %v224, 16
      %v390 = vrot.slane %v388, 5
      %v391 = vor.u32 %v387, %v390
      %v392 = vrot.slane %v391, 4
      %v394 = vshll.u32 %v225, 16
      %v396 = vrot.slane %v394, 5
      %v397 = vsel %vm239, %v392, %v396
      %v398 = vshrl.u32 %v225, 16
      %v400 = vrot.slane %v398, 4
      %v401 = vor.u32 %v400, %v396
      %v402 = vrot.slane %v401, 4
      %v404 = vshll.u32 %v226, 16
      %v406 = vrot.slane %v404, 5
      %v407 = vsel %vm239, %v402, %v406
      %v409 = vshrl.u32 %v227, 16
      %v411 = vrot.slane %v409, 4
      %v412 = vshll.u32 %v227, 16
      %v414 = vrot.slane %v412, 5
      %v415 = vor.u32 %v411, %v414
      %v416 = vrot.slane %v415, 4
      %v418 = vshll.u32 %v228, 16
      %v420 = vrot.slane %v418, 5
      %v421 = vsel %vm239, %v416, %v420
      %v422 = vshrl.u32 %v228, 16
      %v424 = vrot.slane %v422, 4
      %v425 = vor.u32 %v424, %v420
      %v426 = vrot.slane %v425, 4
      %v428 = vshll.u32 %v229, 16
      %v430 = vrot.slane %v428, 5
      %v431 = vsel %vm239, %v426, %v430
      %s432 = scalar_lea.vmem %s1, 2
      %v433 = vld [vmem:[%s432] sm:$0x3]
      %v434 = vunpack.c.l.b16 %v253
      %v435 = vunpack.c.l.b16 %v263
      %v436 = vunpack.c.l.b16 %v277
      %v437 = vunpack.c.l.b16 %v287
      %v438 = vunpack.c.l.b16 %v301
      %v439 = vunpack.c.l.b16 %v311
      %v440 = vunpack.c.l.b16 %v325
      %v441 = vunpack.c.l.b16 %v335
      %v442 = vunpack.c.l.b16 %v349
      %v443 = vunpack.c.l.b16 %v359
      %v444 = vunpack.c.l.b16 %v373
      %v445 = vunpack.c.l.b16 %v383
      %v446 = vunpack.c.l.b16 %v397
      %v447 = vunpack.c.l.b16 %v407
      %v448 = vunpack.c.l.b16 %v421
      %v449 = vunpack.c.l.b16 %v431
      %v450 = vpack.c.b16 %v435, %v434
      %v451 = vpack.c.b16 %v437, %v436
      %v452 = vpack.c.b16 %v439, %v438
      %v453 = vpack.c.b16 %v441, %v440
      %v454 = vpack.c.b16 %v443, %v442
      %v455 = vpack.c.b16 %v445, %v444
      %v456 = vpack.c.b16 %v447, %v446
      %v457 = vpack.c.b16 %v449, %v448
      %vm458 = vcmask 31744
      %v460 = vsel %vm458, %v450, 0
      %v463 = vsel %vm458, %v451, 0
      %v466 = vsel %vm458, %v452, 0
      %v469 = vsel %vm458, %v453, 0
      %v472 = vsel %vm458, %v454, 0
      %v475 = vsel %vm458, %v455, 0
      %v478 = vsel %vm458, %v456, 0
      %v481 = vsel %vm458, %v457, 0
      %vm483 = vcmask 1041408
      %v485 = vsel %vm483, %v433, 0
      %487 = vmatprep.subr.bf16.mxu0 0
      %488 = vmatpush1.bf16.msra.mxu0 0
      %489 = vmatprep.subr.bf16.mxu0 0
      %490 = vmatpush1.bf16.msra.mxu0 0
      %491 = vmatprep.subr.bf16.mxu0 0
      %492 = vmatpush1.bf16.msra.mxu0 0
      %493 = vmatprep.subr.bf16.mxu0 0
      %494 = vmatpush1.bf16.msra.mxu0 0
      %495 = vmatprep.subr.bf16.mxu0 0
      %496 = vmatpush1.bf16.msra.mxu0 0
      %497 = vmatprep.subr.bf16.mxu0 0
      %498 = vmatpush1.bf16.msra.mxu0 0
      %499 = vmatprep.subr.bf16.mxu0 0
      %500 = vmatpush1.bf16.msra.mxu0 0
      %501 = vmatprep.subr.bf16.mxu0 0
      %502 = vmatpush1.bf16.msra.mxu0 %v485
      %503 = vmatprep.subr.bf16.mxu0 0
      %504 = vmatpush2.bf16.msra.mxu0 0
      %505 = vmatprep.subr.bf16.mxu0 0
      %506 = vmatpush2.bf16.msra.mxu0 0
      %507 = vmatprep.subr.bf16.mxu0 0
      %508 = vmatpush2.bf16.msra.mxu0 0
      %509 = vmatprep.subr.bf16.mxu0 0
      %510 = vmatpush2.bf16.msra.mxu0 0
      %511 = vmatprep.subr.bf16.mxu0 0
      %512 = vmatpush2.bf16.msra.mxu0 0
      %513 = vmatprep.subr.bf16.mxu0 0
      %514 = vmatpush2.bf16.msra.mxu0 0
      %515 = vmatprep.subr.bf16.mxu0 0
      %516 = vmatpush2.bf16.msra.mxu0 0
      %517 = vmatprep.subr.bf16.mxu0 0
      %518 = vmatpush2.bf16.msra.mxu0 0
      %519 = vmatprep.mubr.bf16.mxu0 0
      %520 = vmatmul.mubr.bf16.gmra.mxu0 %v460
      %v521 = vpop.f32.mrf.mxu0
      %v522 = vadd.f32 0.0, %v521
      %v523 = vpop.f32.mrf.mxu0
      %v524 = vpop.f32.mrf.mxu0
      %v525 = vadd.f32 0.0, %v524
      %v526 = vpop.f32.mrf.mxu0
      %527 = vmatprep.mubr.bf16.mxu0 0
      %528 = vmatmul.mubr.bf16.gmra.mxu0 %v463
      %v529 = vpop.f32.mrf.mxu0
      %v530 = vadd.f32 0.0, %v529
      %v531 = vpop.f32.mrf.mxu0
      %v532 = vpop.f32.mrf.mxu0
      %v533 = vadd.f32 0.0, %v532
      %v534 = vpop.f32.mrf.mxu0
      %535 = vmatprep.mubr.bf16.mxu0 0
      %536 = vmatmul.mubr.bf16.gmra.mxu0 %v466
      %v537 = vpop.f32.mrf.mxu0
      %v538 = vadd.f32 0.0, %v537
      %v539 = vpop.f32.mrf.mxu0
      %v540 = vpop.f32.mrf.mxu0
      %v541 = vadd.f32 0.0, %v540
      %v542 = vpop.f32.mrf.mxu0
      %543 = vmatprep.mubr.bf16.mxu0 0
      %544 = vmatmul.mubr.bf16.gmra.mxu0 %v469
      %v545 = vpop.f32.mrf.mxu0
      %v546 = vadd.f32 0.0, %v545
      %v547 = vpop.f32.mrf.mxu0
      %v548 = vpop.f32.mrf.mxu0
      %v549 = vadd.f32 0.0, %v548
      %v550 = vpop.f32.mrf.mxu0
      %551 = vmatprep.mubr.bf16.mxu0 0
      %552 = vmatmul.mubr.bf16.gmra.mxu0 %v472
      %v553 = vpop.f32.mrf.mxu0
      %v554 = vadd.f32 0.0, %v553
      %v555 = vpop.f32.mrf.mxu0
      %v556 = vpop.f32.mrf.mxu0
      %v557 = vadd.f32 0.0, %v556
      %v558 = vpop.f32.mrf.mxu0
      %559 = vmatprep.mubr.bf16.mxu0 0
      %560 = vmatmul.mubr.bf16.gmra.mxu0 %v475
      %v561 = vpop.f32.mrf.mxu0
      %v562 = vadd.f32 0.0, %v561
      %v563 = vpop.f32.mrf.mxu0
      %v564 = vpop.f32.mrf.mxu0
      %v565 = vadd.f32 0.0, %v564
      %v566 = vpop.f32.mrf.mxu0
      %567 = vmatprep.mubr.bf16.mxu0 0
      %568 = vmatmul.mubr.bf16.gmra.mxu0 %v478
      %v569 = vpop.f32.mrf.mxu0
      %v570 = vadd.f32 0.0, %v569
      %v571 = vpop.f32.mrf.mxu0
      %v572 = vpop.f32.mrf.mxu0
      %v573 = vadd.f32 0.0, %v572
      %v574 = vpop.f32.mrf.mxu0
      %575 = vmatprep.mubr.bf16.mxu0 0
      %576 = vmatmul.mubr.bf16.gmra.mxu0 %v481
      %v577 = vpop.f32.mrf.mxu0
      %v578 = vadd.f32 0.0, %v577
      %v579 = vpop.f32.mrf.mxu0
      %v580 = vpop.f32.mrf.mxu0
      %v581 = vadd.f32 0.0, %v580
      %v582 = vpop.f32.mrf.mxu0
      %583 = vdwg.mxu0
      %v600 = vunpack.c.l.b16 %v206
      %v601 = vunpack.c.l.b16 %v207
      %v602 = vunpack.c.l.b16 %v209
      %v603 = vunpack.c.l.b16 %v210
      %v604 = vunpack.c.l.b16 %v212
      %v605 = vunpack.c.l.b16 %v213
      %v606 = vunpack.c.l.b16 %v215
      %v607 = vunpack.c.l.b16 %v216
      %v608 = vunpack.c.l.b16 %v218
      %v609 = vunpack.c.l.b16 %v219
      %v610 = vunpack.c.l.b16 %v221
      %v611 = vunpack.c.l.b16 %v222
      %v612 = vunpack.c.l.b16 %v224
      %v613 = vunpack.c.l.b16 %v225
      %v614 = vunpack.c.l.b16 %v227
      %v615 = vunpack.c.l.b16 %v228
      %v616 = vpack.c.b16 %v601, %v600
      %v617 = vpack.c.b16 %v603, %v602
      %v618 = vpack.c.b16 %v605, %v604
      %v619 = vpack.c.b16 %v607, %v606
      %v620 = vpack.c.b16 %v609, %v608
      %v621 = vpack.c.b16 %v611, %v610
      %v622 = vpack.c.b16 %v613, %v612
      %v623 = vpack.c.b16 %v615, %v614
      %v625 = vsel %vm458, %v616, 0
      %v628 = vsel %vm458, %v617, 0
      %v631 = vsel %vm458, %v618, 0
      %v634 = vsel %vm458, %v619, 0
      %v637 = vsel %vm458, %v620, 0
      %v640 = vsel %vm458, %v621, 0
      %v643 = vsel %vm458, %v622, 0
      %v646 = vsel %vm458, %v623, 0
      %v649 = vsel %vm483, %v236, 0
      %651 = vmatprep.subr.bf16.mxu0 0
      %652 = vmatpush1.bf16.msra.mxu0 0
      %653 = vmatprep.subr.bf16.mxu0 0
      %654 = vmatpush1.bf16.msra.mxu0 0
      %655 = vmatprep.subr.bf16.mxu0 0
      %656 = vmatpush1.bf16.msra.mxu0 0
      %657 = vmatprep.subr.bf16.mxu0 0
      %658 = vmatpush1.bf16.msra.mxu0 0
      %659 = vmatprep.subr.bf16.mxu0 0
      %660 = vmatpush1.bf16.msra.mxu0 0
      %661 = vmatprep.subr.bf16.mxu0 0
      %662 = vmatpush1.bf16.msra.mxu0 0
      %663 = vmatprep.subr.bf16.mxu0 0
      %664 = vmatpush1.bf16.msra.mxu0 0
      %665 = vmatprep.subr.bf16.mxu0 0
      %666 = vmatpush1.bf16.msra.mxu0 %v649
      %667 = vmatprep.subr.bf16.mxu0 0
      %668 = vmatpush2.bf16.msra.mxu0 0
      %669 = vmatprep.subr.bf16.mxu0 0
      %670 = vmatpush2.bf16.msra.mxu0 0
      %671 = vmatprep.subr.bf16.mxu0 0
      %672 = vmatpush2.bf16.msra.mxu0 0
      %673 = vmatprep.subr.bf16.mxu0 0
      %674 = vmatpush2.bf16.msra.mxu0 0
      %675 = vmatprep.subr.bf16.mxu0 0
      %676 = vmatpush2.bf16.msra.mxu0 0
      %677 = vmatprep.subr.bf16.mxu0 0
      %678 = vmatpush2.bf16.msra.mxu0 0
      %679 = vmatprep.subr.bf16.mxu0 0
      %680 = vmatpush2.bf16.msra.mxu0 0
      %681 = vmatprep.subr.bf16.mxu0 0
      %682 = vmatpush2.bf16.msra.mxu0 0
      %683 = vmatprep.mubr.bf16.mxu0 0
      %684 = vmatmul.mubr.bf16.gmra.mxu0 %v625
      %v685 = vpop.f32.mrf.mxu0
      %v686 = vadd.f32 %v522, %v685
      %v687 = vpop.f32.mrf.mxu0
      %v688 = vpop.f32.mrf.mxu0
      %v689 = vadd.f32 %v525, %v688
      %v690 = vpop.f32.mrf.mxu0
      %691 = vmatprep.mubr.bf16.mxu0 0
      %692 = vmatmul.mubr.bf16.gmra.mxu0 %v628
      %v693 = vpop.f32.mrf.mxu0
      %v694 = vadd.f32 %v530, %v693
      %v695 = vpop.f32.mrf.mxu0
      %v696 = vpop.f32.mrf.mxu0
      %v697 = vadd.f32 %v533, %v696
      %v698 = vpop.f32.mrf.mxu0
      %699 = vmatprep.mubr.bf16.mxu0 0
      %700 = vmatmul.mubr.bf16.gmra.mxu0 %v631
      %v701 = vpop.f32.mrf.mxu0
      %v702 = vadd.f32 %v538, %v701
      %v703 = vpop.f32.mrf.mxu0
      %v704 = vpop.f32.mrf.mxu0
      %v705 = vadd.f32 %v541, %v704
      %v706 = vpop.f32.mrf.mxu0
      %707 = vmatprep.mubr.bf16.mxu0 0
      %708 = vmatmul.mubr.bf16.gmra.mxu0 %v634
      %v709 = vpop.f32.mrf.mxu0
      %v710 = vadd.f32 %v546, %v709
      %v711 = vpop.f32.mrf.mxu0
      %v712 = vpop.f32.mrf.mxu0
      %v713 = vadd.f32 %v549, %v712
      %v714 = vpop.f32.mrf.mxu0
      %715 = vmatprep.mubr.bf16.mxu0 0
      %716 = vmatmul.mubr.bf16.gmra.mxu0 %v637
      %v717 = vpop.f32.mrf.mxu0
      %v718 = vadd.f32 %v554, %v717
      %v719 = vpop.f32.mrf.mxu0
      %v720 = vpop.f32.mrf.mxu0
      %v721 = vadd.f32 %v557, %v720
      %v722 = vpop.f32.mrf.mxu0
      %723 = vmatprep.mubr.bf16.mxu0 0
      %724 = vmatmul.mubr.bf16.gmra.mxu0 %v640
      %v725 = vpop.f32.mrf.mxu0
      %v726 = vadd.f32 %v562, %v725
      %v727 = vpop.f32.mrf.mxu0
      %v728 = vpop.f32.mrf.mxu0
      %v729 = vadd.f32 %v565, %v728
      %v730 = vpop.f32.mrf.mxu0
      %731 = vmatprep.mubr.bf16.mxu0 0
      %732 = vmatmul.mubr.bf16.gmra.mxu0 %v643
      %v733 = vpop.f32.mrf.mxu0
      %v734 = vadd.f32 %v570, %v733
      %v735 = vpop.f32.mrf.mxu0
      %v736 = vpop.f32.mrf.mxu0
      %v737 = vadd.f32 %v573, %v736
      %v738 = vpop.f32.mrf.mxu0
      %739 = vmatprep.mubr.bf16.mxu0 0
      %740 = vmatmul.mubr.bf16.gmra.mxu0 %v646
      %v741 = vpop.f32.mrf.mxu0
      %v742 = vadd.f32 %v578, %v741
      %v743 = vpop.f32.mrf.mxu0
      %v744 = vpop.f32.mrf.mxu0
      %v745 = vadd.f32 %v581, %v744
      %v746 = vpop.f32.mrf.mxu0
      %747 = vdwg.mxu0
      %vm756 = vcmask 1042432
      %vm757 = vcmask 1046532
      %vm758 = vmor %vm756, %vm757
      %v759 = vrot.slane %v206, 5
      %v760 = vrot.slane %v759, 4
      %v761 = vrot.slane %v207, 5
      %v762 = vsel %vm758, %v760, %v761
      %v763 = vrot.slane %v761, 4
      %v764 = vrot.slane %v208, 5
      %v765 = vsel %vm758, %v763, %v764
      %v766 = vrot.slane %v209, 5
      %v767 = vrot.slane %v766, 4
      %v768 = vrot.slane %v210, 5
      %v769 = vsel %vm758, %v767, %v768
      %v770 = vrot.slane %v768, 4
      %v771 = vrot.slane %v211, 5
      %v772 = vsel %vm758, %v770, %v771
      %v773 = vrot.slane %v212, 5
      %v774 = vrot.slane %v773, 4
      %v775 = vrot.slane %v213, 5
      %v776 = vsel %vm758, %v774, %v775
      %v777 = vrot.slane %v775, 4
      %v778 = vrot.slane %v214, 5
      %v779 = vsel %vm758, %v777, %v778
      %v780 = vrot.slane %v215, 5
      %v781 = vrot.slane %v780, 4
      %v782 = vrot.slane %v216, 5
      %v783 = vsel %vm758, %v781, %v782
      %v784 = vrot.slane %v782, 4
      %v785 = vrot.slane %v217, 5
      %v786 = vsel %vm758, %v784, %v785
      %v787 = vrot.slane %v218, 5
      %v788 = vrot.slane %v787, 4
      %v789 = vrot.slane %v219, 5
      %v790 = vsel %vm758, %v788, %v789
      %v791 = vrot.slane %v789, 4
      %v792 = vrot.slane %v220, 5
      %v793 = vsel %vm758, %v791, %v792
      %v794 = vrot.slane %v221, 5
      %v795 = vrot.slane %v794, 4
      %v796 = vrot.slane %v222, 5
      %v797 = vsel %vm758, %v795, %v796
      %v798 = vrot.slane %v796, 4
      %v799 = vrot.slane %v223, 5
      %v800 = vsel %vm758, %v798, %v799
      %v801 = vrot.slane %v224, 5
      %v802 = vrot.slane %v801, 4
      %v803 = vrot.slane %v225, 5
      %v804 = vsel %vm758, %v802, %v803
      %v805 = vrot.slane %v803, 4
      %v806 = vrot.slane %v226, 5
      %v807 = vsel %vm758, %v805, %v806
      %v808 = vrot.slane %v227, 5
      %v809 = vrot.slane %v808, 4
      %v810 = vrot.slane %v228, 5
      %v811 = vsel %vm758, %v809, %v810
      %v812 = vrot.slane %v810, 4
      %v813 = vrot.slane %v229, 5
      %v814 = vsel %vm758, %v812, %v813
      %s815 = scalar_lea.vmem %s1, 4
      %v816 = vld [vmem:[%s815] sm:$0x3]
      %v817 = vunpack.c.l.b16 %v762
      %v818 = vunpack.c.l.b16 %v765
      %v819 = vunpack.c.l.b16 %v769
      %v820 = vunpack.c.l.b16 %v772
      %v821 = vunpack.c.l.b16 %v776
      %v822 = vunpack.c.l.b16 %v779
      %v823 = vunpack.c.l.b16 %v783
      %v824 = vunpack.c.l.b16 %v786
      %v825 = vunpack.c.l.b16 %v790
      %v826 = vunpack.c.l.b16 %v793
      %v827 = vunpack.c.l.b16 %v797
      %v828 = vunpack.c.l.b16 %v800
      %v829 = vunpack.c.l.b16 %v804
      %v830 = vunpack.c.l.b16 %v807
      %v831 = vunpack.c.l.b16 %v811
      %v832 = vunpack.c.l.b16 %v814
      %v833 = vpack.c.b16 %v818, %v817
      %v834 = vpack.c.b16 %v820, %v819
      %v835 = vpack.c.b16 %v822, %v821
      %v836 = vpack.c.b16 %v824, %v823
      %v837 = vpack.c.b16 %v826, %v825
      %v838 = vpack.c.b16 %v828, %v827
      %v839 = vpack.c.b16 %v830, %v829
      %v840 = vpack.c.b16 %v832, %v831
      %v842 = vsel %vm458, %v833, 0
      %v845 = vsel %vm458, %v834, 0
      %v848 = vsel %vm458, %v835, 0
      %v851 = vsel %vm458, %v836, 0
      %v854 = vsel %vm458, %v837, 0
      %v857 = vsel %vm458, %v838, 0
      %v860 = vsel %vm458, %v839, 0
      %v863 = vsel %vm458, %v840, 0
      %v866 = vsel %vm483, %v816, 0
      %868 = vmatprep.subr.bf16.mxu0 0
      %869 = vmatpush1.bf16.msra.mxu0 0
      %870 = vmatprep.subr.bf16.mxu0 0
      %871 = vmatpush1.bf16.msra.mxu0 0
      %872 = vmatprep.subr.bf16.mxu0 0
      %873 = vmatpush1.bf16.msra.mxu0 0
      %874 = vmatprep.subr.bf16.mxu0 0
      %875 = vmatpush1.bf16.msra.mxu0 0
      %876 = vmatprep.subr.bf16.mxu0 0
      %877 = vmatpush1.bf16.msra.mxu0 0
      %878 = vmatprep.subr.bf16.mxu0 0
      %879 = vmatpush1.bf16.msra.mxu0 0
      %880 = vmatprep.subr.bf16.mxu0 0
      %881 = vmatpush1.bf16.msra.mxu0 0
      %882 = vmatprep.subr.bf16.mxu0 0
      %883 = vmatpush1.bf16.msra.mxu0 %v866
      %884 = vmatprep.subr.bf16.mxu0 0
      %885 = vmatpush2.bf16.msra.mxu0 0
      %886 = vmatprep.subr.bf16.mxu0 0
      %887 = vmatpush2.bf16.msra.mxu0 0
      %888 = vmatprep.subr.bf16.mxu0 0
      %889 = vmatpush2.bf16.msra.mxu0 0
      %890 = vmatprep.subr.bf16.mxu0 0
      %891 = vmatpush2.bf16.msra.mxu0 0
      %892 = vmatprep.subr.bf16.mxu0 0
      %893 = vmatpush2.bf16.msra.mxu0 0
      %894 = vmatprep.subr.bf16.mxu0 0
      %895 = vmatpush2.bf16.msra.mxu0 0
      %896 = vmatprep.subr.bf16.mxu0 0
      %897 = vmatpush2.bf16.msra.mxu0 0
      %898 = vmatprep.subr.bf16.mxu0 0
      %899 = vmatpush2.bf16.msra.mxu0 0
      %900 = vmatprep.mubr.bf16.mxu0 0
      %901 = vmatmul.mubr.bf16.gmra.mxu0 %v842
      %v902 = vpop.f32.mrf.mxu0
      %v903 = vadd.f32 0.0, %v902
      %v904 = vpop.f32.mrf.mxu0
      %v905 = vpop.f32.mrf.mxu0
      %v906 = vadd.f32 0.0, %v905
      %v907 = vpop.f32.mrf.mxu0
      %908 = vmatprep.mubr.bf16.mxu0 0
      %909 = vmatmul.mubr.bf16.gmra.mxu0 %v845
      %v910 = vpop.f32.mrf.mxu0
      %v911 = vadd.f32 0.0, %v910
      %v912 = vpop.f32.mrf.mxu0
      %v913 = vpop.f32.mrf.mxu0
      %v914 = vadd.f32 0.0, %v913
      %v915 = vpop.f32.mrf.mxu0
      %916 = vmatprep.mubr.bf16.mxu0 0
      %917 = vmatmul.mubr.bf16.gmra.mxu0 %v848
      %v918 = vpop.f32.mrf.mxu0
      %v919 = vadd.f32 0.0, %v918
      %v920 = vpop.f32.mrf.mxu0
      %v921 = vpop.f32.mrf.mxu0
      %v922 = vadd.f32 0.0, %v921
      %v923 = vpop.f32.mrf.mxu0
      %924 = vmatprep.mubr.bf16.mxu0 0
      %925 = vmatmul.mubr.bf16.gmra.mxu0 %v851
      %v926 = vpop.f32.mrf.mxu0
      %v927 = vadd.f32 0.0, %v926
      %v928 = vpop.f32.mrf.mxu0
      %v929 = vpop.f32.mrf.mxu0
      %v930 = vadd.f32 0.0, %v929
      %v931 = vpop.f32.mrf.mxu0
      %932 = vmatprep.mubr.bf16.mxu0 0
      %933 = vmatmul.mubr.bf16.gmra.mxu0 %v854
      %v934 = vpop.f32.mrf.mxu0
      %v935 = vadd.f32 0.0, %v934
      %v936 = vpop.f32.mrf.mxu0
      %v937 = vpop.f32.mrf.mxu0
      %v938 = vadd.f32 0.0, %v937
      %v939 = vpop.f32.mrf.mxu0
      %940 = vmatprep.mubr.bf16.mxu0 0
      %941 = vmatmul.mubr.bf16.gmra.mxu0 %v857
      %v942 = vpop.f32.mrf.mxu0
      %v943 = vadd.f32 0.0, %v942
      %v944 = vpop.f32.mrf.mxu0
      %v945 = vpop.f32.mrf.mxu0
      %v946 = vadd.f32 0.0, %v945
      %v947 = vpop.f32.mrf.mxu0
      %948 = vmatprep.mubr.bf16.mxu0 0
      %949 = vmatmul.mubr.bf16.gmra.mxu0 %v860
      %v950 = vpop.f32.mrf.mxu0
      %v951 = vadd.f32 0.0, %v950
      %v952 = vpop.f32.mrf.mxu0
      %v953 = vpop.f32.mrf.mxu0
      %v954 = vadd.f32 0.0, %v953
      %v955 = vpop.f32.mrf.mxu0
      %956 = vmatprep.mubr.bf16.mxu0 0
      %957 = vmatmul.mubr.bf16.gmra.mxu0 %v863
      %v958 = vpop.f32.mrf.mxu0
      %v959 = vadd.f32 0.0, %v958
      %v960 = vpop.f32.mrf.mxu0
      %v961 = vpop.f32.mrf.mxu0
      %v962 = vadd.f32 0.0, %v961
      %v963 = vpop.f32.mrf.mxu0
      %964 = vdwg.mxu0
      %v965 = vadd.f32 %v686, %v903
      %v966 = vadd.f32 %v689, %v906
      %v967 = vadd.f32 %v694, %v911
      %v968 = vadd.f32 %v697, %v914
      %v969 = vadd.f32 %v702, %v919
      %v970 = vadd.f32 %v705, %v922
      %v971 = vadd.f32 %v710, %v927
      %v972 = vadd.f32 %v713, %v930
      %v973 = vadd.f32 %v718, %v935
      %v974 = vadd.f32 %v721, %v938
      %v975 = vadd.f32 %v726, %v943
      %v976 = vadd.f32 %v729, %v946
      %v977 = vadd.f32 %v734, %v951
      %v978 = vadd.f32 %v737, %v954
      %v979 = vadd.f32 %v742, %v959
      %v980 = vadd.f32 %v745, %v962
      %s981 = scalar_lea.vmem %s1, 6
      %v982 = vld [vmem:[%s981] sm:$0x3]
      %v985 = vunpack.c.l.b16 %v230
      %v986 = vunpack.c.l.b16 %v231
      %v987 = vpack.c.b16 %v986, %v985
      %v989 = vsel %vm458, %v987, 0
      %v992 = vsel %vm483, %v982, 0
      %994 = vmatprep.subr.bf16.mxu0 0
      %995 = vmatpush1.bf16.msra.mxu0 0
      %996 = vmatprep.subr.bf16.mxu0 0
      %997 = vmatpush1.bf16.msra.mxu0 0
      %998 = vmatprep.subr.bf16.mxu0 0
      %999 = vmatpush1.bf16.msra.mxu0 0
      %1000 = vmatprep.subr.bf16.mxu0 0
      %1001 = vmatpush1.bf16.msra.mxu0 0
      %1002 = vmatprep.subr.bf16.mxu0 0
      %1003 = vmatpush1.bf16.msra.mxu0 0
      %1004 = vmatprep.subr.bf16.mxu0 0
      %1005 = vmatpush1.bf16.msra.mxu0 0
      %1006 = vmatprep.subr.bf16.mxu0 0
      %1007 = vmatpush1.bf16.msra.mxu0 0
      %1008 = vmatprep.subr.bf16.mxu0 0
      %1009 = vmatpush1.bf16.msra.mxu0 %v992
      %1010 = vmatprep.subr.bf16.mxu0 0
      %1011 = vmatpush2.bf16.msra.mxu0 0
      %1012 = vmatprep.subr.bf16.mxu0 0
      %1013 = vmatpush2.bf16.msra.mxu0 0
      %1014 = vmatprep.subr.bf16.mxu0 0
      %1015 = vmatpush2.bf16.msra.mxu0 0
      %1016 = vmatprep.subr.bf16.mxu0 0
      %1017 = vmatpush2.bf16.msra.mxu0 0
      %1018 = vmatprep.subr.bf16.mxu0 0
      %1019 = vmatpush2.bf16.msra.mxu0 0
      %1020 = vmatprep.subr.bf16.mxu0 0
      %1021 = vmatpush2.bf16.msra.mxu0 0
      %1022 = vmatprep.subr.bf16.mxu0 0
      %1023 = vmatpush2.bf16.msra.mxu0 0
      %1024 = vmatprep.subr.bf16.mxu0 0
      %1025 = vmatpush2.bf16.msra.mxu0 0
      %1026 = vmatprep.mubr.bf16.mxu0 0
      %1027 = vmatmul.mubr.bf16.gmra.mxu0 %v628
      %v1028 = vpop.f32.mrf.mxu0
      %v1029 = vadd.f32 0.0, %v1028
      %v1030 = vpop.f32.mrf.mxu0
      %v1031 = vpop.f32.mrf.mxu0
      %v1032 = vadd.f32 0.0, %v1031
      %v1033 = vpop.f32.mrf.mxu0
      %1034 = vmatprep.mubr.bf16.mxu0 0
      %1035 = vmatmul.mubr.bf16.gmra.mxu0 %v631
      %v1036 = vpop.f32.mrf.mxu0
      %v1037 = vadd.f32 0.0, %v1036
      %v1038 = vpop.f32.mrf.mxu0
      %v1039 = vpop.f32.mrf.mxu0
      %v1040 = vadd.f32 0.0, %v1039
      %v1041 = vpop.f32.mrf.mxu0
      %1042 = vmatprep.mubr.bf16.mxu0 0
      %1043 = vmatmul.mubr.bf16.gmra.mxu0 %v634
      %v1044 = vpop.f32.mrf.mxu0
      %v1045 = vadd.f32 0.0, %v1044
      %v1046 = vpop.f32.mrf.mxu0
      %v1047 = vpop.f32.mrf.mxu0
      %v1048 = vadd.f32 0.0, %v1047
      %v1049 = vpop.f32.mrf.mxu0
      %1050 = vmatprep.mubr.bf16.mxu0 0
      %1051 = vmatmul.mubr.bf16.gmra.mxu0 %v637
      %v1052 = vpop.f32.mrf.mxu0
      %v1053 = vadd.f32 0.0, %v1052
      %v1054 = vpop.f32.mrf.mxu0
      %v1055 = vpop.f32.mrf.mxu0
      %v1056 = vadd.f32 0.0, %v1055
      %v1057 = vpop.f32.mrf.mxu0
      %1058 = vmatprep.mubr.bf16.mxu0 0
      %1059 = vmatmul.mubr.bf16.gmra.mxu0 %v640
      %v1060 = vpop.f32.mrf.mxu0
      %v1061 = vadd.f32 0.0, %v1060
      %v1062 = vpop.f32.mrf.mxu0
      %v1063 = vpop.f32.mrf.mxu0
      %v1064 = vadd.f32 0.0, %v1063
      %v1065 = vpop.f32.mrf.mxu0
      %1066 = vmatprep.mubr.bf16.mxu0 0
      %1067 = vmatmul.mubr.bf16.gmra.mxu0 %v643
      %v1068 = vpop.f32.mrf.mxu0
      %v1069 = vadd.f32 0.0, %v1068
      %v1070 = vpop.f32.mrf.mxu0
      %v1071 = vpop.f32.mrf.mxu0
      %v1072 = vadd.f32 0.0, %v1071
      %v1073 = vpop.f32.mrf.mxu0
      %1074 = vmatprep.mubr.bf16.mxu0 0
      %1075 = vmatmul.mubr.bf16.gmra.mxu0 %v646
      %v1076 = vpop.f32.mrf.mxu0
      %v1077 = vadd.f32 0.0, %v1076
      %v1078 = vpop.f32.mrf.mxu0
      %v1079 = vpop.f32.mrf.mxu0
      %v1080 = vadd.f32 0.0, %v1079
      %v1081 = vpop.f32.mrf.mxu0
      %1082 = vmatprep.mubr.bf16.mxu0 0
      %1083 = vmatmul.mubr.bf16.gmra.mxu0 %v989
      %v1084 = vpop.f32.mrf.mxu0
      %v1085 = vadd.f32 0.0, %v1084
      %v1086 = vpop.f32.mrf.mxu0
      %v1087 = vpop.f32.mrf.mxu0
      %v1088 = vadd.f32 0.0, %v1087
      %v1089 = vpop.f32.mrf.mxu0
      %1090 = vdwg.mxu0
      %v1091 = vadd.f32 %v965, %v1029
      %v1092 = vadd.f32 %v966, %v1032
      %v1093 = vadd.f32 %v967, %v1037
      %v1094 = vadd.f32 %v968, %v1040
      %v1095 = vadd.f32 %v969, %v1045
      %v1096 = vadd.f32 %v970, %v1048
      %v1097 = vadd.f32 %v971, %v1053
      %v1098 = vadd.f32 %v972, %v1056
      %v1099 = vadd.f32 %v973, %v1061
      %v1100 = vadd.f32 %v974, %v1064
      %v1101 = vadd.f32 %v975, %v1069
      %v1102 = vadd.f32 %v976, %v1072
      %v1103 = vadd.f32 %v977, %v1077
      %v1104 = vadd.f32 %v978, %v1080
      %v1105 = vadd.f32 %v979, %v1085
      %v1106 = vadd.f32 %v980, %v1088
      %v1108 = vshrl.u32 %v230, 16
      %v1110 = vrot.slane %v1108, 4
      %v1111 = vshll.u32 %v230, 16
      %v1113 = vrot.slane %v1111, 5
      %v1114 = vor.u32 %v1110, %v1113
      %v1115 = vrot.slane %v1114, 4
      %v1117 = vshll.u32 %v231, 16
      %v1119 = vrot.slane %v1117, 5
      %v1120 = vsel %vm239, %v1115, %v1119
      %v1121 = vshrl.u32 %v231, 16
      %v1123 = vrot.slane %v1121, 4
      %v1124 = vor.u32 %v1123, %v1119
      %v1125 = vrot.slane %v1124, 4
      %v1127 = vshll.u32 %v232, 16
      %v1129 = vrot.slane %v1127, 5
      %v1130 = vsel %vm239, %v1125, %v1129
      %s1131 = scalar_lea.vmem %s1, 8
      %v1132 = vld [vmem:[%s1131] sm:$0x3]
      %v1133 = vunpack.c.l.b16 %v1120
      %v1134 = vunpack.c.l.b16 %v1130
      %v1135 = vpack.c.b16 %v1134, %v1133
      %v1137 = vsel %vm458, %v1135, 0
      %v1140 = vsel %vm483, %v1132, 0
      %1142 = vmatprep.subr.bf16.mxu0 0
      %1143 = vmatpush1.bf16.msra.mxu0 0
      %1144 = vmatprep.subr.bf16.mxu0 0
      %1145 = vmatpush1.bf16.msra.mxu0 0
      %1146 = vmatprep.subr.bf16.mxu0 0
      %1147 = vmatpush1.bf16.msra.mxu0 0
      %1148 = vmatprep.subr.bf16.mxu0 0
      %1149 = vmatpush1.bf16.msra.mxu0 0
      %1150 = vmatprep.subr.bf16.mxu0 0
      %1151 = vmatpush1.bf16.msra.mxu0 0
      %1152 = vmatprep.subr.bf16.mxu0 0
      %1153 = vmatpush1.bf16.msra.mxu0 0
      %1154 = vmatprep.subr.bf16.mxu0 0
      %1155 = vmatpush1.bf16.msra.mxu0 0
      %1156 = vmatprep.subr.bf16.mxu0 0
      %1157 = vmatpush1.bf16.msra.mxu0 %v1140
      %1158 = vmatprep.subr.bf16.mxu0 0
      %1159 = vmatpush2.bf16.msra.mxu0 0
      %1160 = vmatprep.subr.bf16.mxu0 0
      %1161 = vmatpush2.bf16.msra.mxu0 0
      %1162 = vmatprep.subr.bf16.mxu0 0
      %1163 = vmatpush2.bf16.msra.mxu0 0
      %1164 = vmatprep.subr.bf16.mxu0 0
      %1165 = vmatpush2.bf16.msra.mxu0 0
      %1166 = vmatprep.subr.bf16.mxu0 0
      %1167 = vmatpush2.bf16.msra.mxu0 0
      %1168 = vmatprep.subr.bf16.mxu0 0
      %1169 = vmatpush2.bf16.msra.mxu0 0
      %1170 = vmatprep.subr.bf16.mxu0 0
      %1171 = vmatpush2.bf16.msra.mxu0 0
      %1172 = vmatprep.subr.bf16.mxu0 0
      %1173 = vmatpush2.bf16.msra.mxu0 0
      %1174 = vmatprep.mubr.bf16.mxu0 0
      %1175 = vmatmul.mubr.bf16.gmra.mxu0 %v463
      %v1176 = vpop.f32.mrf.mxu0
      %v1177 = vadd.f32 0.0, %v1176
      %v1178 = vpop.f32.mrf.mxu0
      %v1179 = vpop.f32.mrf.mxu0
      %v1180 = vadd.f32 0.0, %v1179
      %v1181 = vpop.f32.mrf.mxu0
      %1182 = vmatprep.mubr.bf16.mxu0 0
      %1183 = vmatmul.mubr.bf16.gmra.mxu0 %v466
      %v1184 = vpop.f32.mrf.mxu0
      %v1185 = vadd.f32 0.0, %v1184
      %v1186 = vpop.f32.mrf.mxu0
      %v1187 = vpop.f32.mrf.mxu0
      %v1188 = vadd.f32 0.0, %v1187
      %v1189 = vpop.f32.mrf.mxu0
      %1190 = vmatprep.mubr.bf16.mxu0 0
      %1191 = vmatmul.mubr.bf16.gmra.mxu0 %v469
      %v1192 = vpop.f32.mrf.mxu0
      %v1193 = vadd.f32 0.0, %v1192
      %v1194 = vpop.f32.mrf.mxu0
      %v1195 = vpop.f32.mrf.mxu0
      %v1196 = vadd.f32 0.0, %v1195
      %v1197 = vpop.f32.mrf.mxu0
      %1198 = vmatprep.mubr.bf16.mxu0 0
      %1199 = vmatmul.mubr.bf16.gmra.mxu0 %v472
      %v1200 = vpop.f32.mrf.mxu0
      %v1201 = vadd.f32 0.0, %v1200
      %v1202 = vpop.f32.mrf.mxu0
      %v1203 = vpop.f32.mrf.mxu0
      %v1204 = vadd.f32 0.0, %v1203
      %v1205 = vpop.f32.mrf.mxu0
      %1206 = vmatprep.mubr.bf16.mxu0 0
      %1207 = vmatmul.mubr.bf16.gmra.mxu0 %v475
      %v1208 = vpop.f32.mrf.mxu0
      %v1209 = vadd.f32 0.0, %v1208
      %v1210 = vpop.f32.mrf.mxu0
      %v1211 = vpop.f32.mrf.mxu0
      %v1212 = vadd.f32 0.0, %v1211
      %v1213 = vpop.f32.mrf.mxu0
      %1214 = vmatprep.mubr.bf16.mxu0 0
      %1215 = vmatmul.mubr.bf16.gmra.mxu0 %v478
      %v1216 = vpop.f32.mrf.mxu0
      %v1217 = vadd.f32 0.0, %v1216
      %v1218 = vpop.f32.mrf.mxu0
      %v1219 = vpop.f32.mrf.mxu0
      %v1220 = vadd.f32 0.0, %v1219
      %v1221 = vpop.f32.mrf.mxu0
      %1222 = vmatprep.mubr.bf16.mxu0 0
      %1223 = vmatmul.mubr.bf16.gmra.mxu0 %v481
      %v1224 = vpop.f32.mrf.mxu0
      %v1225 = vadd.f32 0.0, %v1224
      %v1226 = vpop.f32.mrf.mxu0
      %v1227 = vpop.f32.mrf.mxu0
      %v1228 = vadd.f32 0.0, %v1227
      %v1229 = vpop.f32.mrf.mxu0
      %1230 = vmatprep.mubr.bf16.mxu0 0
      %1231 = vmatmul.mubr.bf16.gmra.mxu0 %v1137
      %v1232 = vpop.f32.mrf.mxu0
      %v1233 = vadd.f32 0.0, %v1232
      %v1234 = vpop.f32.mrf.mxu0
      %v1235 = vpop.f32.mrf.mxu0
      %v1236 = vadd.f32 0.0, %v1235
      %v1237 = vpop.f32.mrf.mxu0
      %1238 = vdwg.mxu0
      %v1239 = vadd.f32 %v1091, %v1177
      %v1240 = vadd.f32 %v1092, %v1180
      %v1241 = vadd.f32 %v1093, %v1185
      %v1242 = vadd.f32 %v1094, %v1188
      %v1243 = vadd.f32 %v1095, %v1193
      %v1244 = vadd.f32 %v1096, %v1196
      %v1245 = vadd.f32 %v1097, %v1201
      %v1246 = vadd.f32 %v1098, %v1204
      %v1247 = vadd.f32 %v1099, %v1209
      %v1248 = vadd.f32 %v1100, %v1212
      %v1249 = vadd.f32 %v1101, %v1217
      %v1250 = vadd.f32 %v1102, %v1220
      %v1251 = vadd.f32 %v1103, %v1225
      %v1252 = vadd.f32 %v1104, %v1228
      %v1253 = vadd.f32 %v1105, %v1233
      %v1254 = vadd.f32 %v1106, %v1236
      %v1256 = vrot.slane %v230, 5
      %v1257 = vrot.slane %v1256, 4
      %v1258 = vrot.slane %v231, 5
      %v1259 = vsel %vm758, %v1257, %v1258
      %v1260 = vrot.slane %v1258, 4
      %v1261 = vrot.slane %v232, 5
      %v1262 = vsel %vm758, %v1260, %v1261
      %s1263 = scalar_lea.vmem %s1, 10
      %v1264 = vld [vmem:[%s1263] sm:$0x3]
      %v1265 = vunpack.c.l.b16 %v1259
      %v1266 = vunpack.c.l.b16 %v1262
      %v1267 = vpack.c.b16 %v1266, %v1265
      %v1269 = vsel %vm458, %v1267, 0
      %v1272 = vsel %vm483, %v1264, 0
      %1274 = vmatprep.subr.bf16.mxu0 0
      %1275 = vmatpush1.bf16.msra.mxu0 0
      %1276 = vmatprep.subr.bf16.mxu0 0
      %1277 = vmatpush1.bf16.msra.mxu0 0
      %1278 = vmatprep.subr.bf16.mxu0 0
      %1279 = vmatpush1.bf16.msra.mxu0 0
      %1280 = vmatprep.subr.bf16.mxu0 0
      %1281 = vmatpush1.bf16.msra.mxu0 0
      %1282 = vmatprep.subr.bf16.mxu0 0
      %1283 = vmatpush1.bf16.msra.mxu0 0
      %1284 = vmatprep.subr.bf16.mxu0 0
      %1285 = vmatpush1.bf16.msra.mxu0 0
      %1286 = vmatprep.subr.bf16.mxu0 0
      %1287 = vmatpush1.bf16.msra.mxu0 0
      %1288 = vmatprep.subr.bf16.mxu0 0
      %1289 = vmatpush1.bf16.msra.mxu0 %v1272
      %1290 = vmatprep.subr.bf16.mxu0 0
      %1291 = vmatpush2.bf16.msra.mxu0 0
      %1292 = vmatprep.subr.bf16.mxu0 0
      %1293 = vmatpush2.bf16.msra.mxu0 0
      %1294 = vmatprep.subr.bf16.mxu0 0
      %1295 = vmatpush2.bf16.msra.mxu0 0
      %1296 = vmatprep.subr.bf16.mxu0 0
      %1297 = vmatpush2.bf16.msra.mxu0 0
      %1298 = vmatprep.subr.bf16.mxu0 0
      %1299 = vmatpush2.bf16.msra.mxu0 0
      %1300 = vmatprep.subr.bf16.mxu0 0
      %1301 = vmatpush2.bf16.msra.mxu0 0
      %1302 = vmatprep.subr.bf16.mxu0 0
      %1303 = vmatpush2.bf16.msra.mxu0 0
      %1304 = vmatprep.subr.bf16.mxu0 0
      %1305 = vmatpush2.bf16.msra.mxu0 0
      %1306 = vmatprep.mubr.bf16.mxu0 0
      %1307 = vmatmul.mubr.bf16.gmra.mxu0 %v845
      %v1308 = vpop.f32.mrf.mxu0
      %v1309 = vadd.f32 0.0, %v1308
      %v1310 = vpop.f32.mrf.mxu0
      %v1311 = vpop.f32.mrf.mxu0
      %v1312 = vadd.f32 0.0, %v1311
      %v1313 = vpop.f32.mrf.mxu0
      %1314 = vmatprep.mubr.bf16.mxu0 0
      %1315 = vmatmul.mubr.bf16.gmra.mxu0 %v848
      %v1316 = vpop.f32.mrf.mxu0
      %v1317 = vadd.f32 0.0, %v1316
      %v1318 = vpop.f32.mrf.mxu0
      %v1319 = vpop.f32.mrf.mxu0
      %v1320 = vadd.f32 0.0, %v1319
      %v1321 = vpop.f32.mrf.mxu0
      %1322 = vmatprep.mubr.bf16.mxu0 0
      %1323 = vmatmul.mubr.bf16.gmra.mxu0 %v851
      %v1324 = vpop.f32.mrf.mxu0
      %v1325 = vadd.f32 0.0, %v1324
      %v1326 = vpop.f32.mrf.mxu0
      %v1327 = vpop.f32.mrf.mxu0
      %v1328 = vadd.f32 0.0, %v1327
      %v1329 = vpop.f32.mrf.mxu0
      %1330 = vmatprep.mubr.bf16.mxu0 0
      %1331 = vmatmul.mubr.bf16.gmra.mxu0 %v854
      %v1332 = vpop.f32.mrf.mxu0
      %v1333 = vadd.f32 0.0, %v1332
      %v1334 = vpop.f32.mrf.mxu0
      %v1335 = vpop.f32.mrf.mxu0
      %v1336 = vadd.f32 0.0, %v1335
      %v1337 = vpop.f32.mrf.mxu0
      %1338 = vmatprep.mubr.bf16.mxu0 0
      %1339 = vmatmul.mubr.bf16.gmra.mxu0 %v857
      %v1340 = vpop.f32.mrf.mxu0
      %v1341 = vadd.f32 0.0, %v1340
      %v1342 = vpop.f32.mrf.mxu0
      %v1343 = vpop.f32.mrf.mxu0
      %v1344 = vadd.f32 0.0, %v1343
      %v1345 = vpop.f32.mrf.mxu0
      %1346 = vmatprep.mubr.bf16.mxu0 0
      %1347 = vmatmul.mubr.bf16.gmra.mxu0 %v860
      %v1348 = vpop.f32.mrf.mxu0
      %v1349 = vadd.f32 0.0, %v1348
      %v1350 = vpop.f32.mrf.mxu0
      %v1351 = vpop.f32.mrf.mxu0
      %v1352 = vadd.f32 0.0, %v1351
      %v1353 = vpop.f32.mrf.mxu0
      %1354 = vmatprep.mubr.bf16.mxu0 0
      %1355 = vmatmul.mubr.bf16.gmra.mxu0 %v863
      %v1356 = vpop.f32.mrf.mxu0
      %v1357 = vadd.f32 0.0, %v1356
      %v1358 = vpop.f32.mrf.mxu0
      %v1359 = vpop.f32.mrf.mxu0
      %v1360 = vadd.f32 0.0, %v1359
      %v1361 = vpop.f32.mrf.mxu0
      %1362 = vmatprep.mubr.bf16.mxu0 0
      %1363 = vmatmul.mubr.bf16.gmra.mxu0 %v1269
      %v1364 = vpop.f32.mrf.mxu0
      %v1365 = vadd.f32 0.0, %v1364
      %v1366 = vpop.f32.mrf.mxu0
      %v1367 = vpop.f32.mrf.mxu0
      %v1368 = vadd.f32 0.0, %v1367
      %v1369 = vpop.f32.mrf.mxu0
      %1370 = vdwg.mxu0
      %v1371 = vadd.f32 %v1239, %v1309
      %v1372 = vadd.f32 %v1240, %v1312
      %v1373 = vadd.f32 %v1241, %v1317
      %v1374 = vadd.f32 %v1242, %v1320
      %v1375 = vadd.f32 %v1243, %v1325
      %v1376 = vadd.f32 %v1244, %v1328
      %v1377 = vadd.f32 %v1245, %v1333
      %v1378 = vadd.f32 %v1246, %v1336
      %v1379 = vadd.f32 %v1247, %v1341
      %v1380 = vadd.f32 %v1248, %v1344
      %v1381 = vadd.f32 %v1249, %v1349
      %v1382 = vadd.f32 %v1250, %v1352
      %v1383 = vadd.f32 %v1251, %v1357
      %v1384 = vadd.f32 %v1252, %v1360
      %v1385 = vadd.f32 %v1253, %v1365
      %v1386 = vadd.f32 %v1254, %v1368
      %s1387 = scalar_lea.vmem %s1, 12
      %v1388 = vld [vmem:[%s1387] sm:$0x3]
      %v1391 = vunpack.c.l.b16 %v233
      %v1392 = vunpack.c.l.b16 %v234
      %v1393 = vpack.c.b16 %v1392, %v1391
      %v1395 = vsel %vm458, %v1393, 0
      %v1398 = vsel %vm483, %v1388, 0
      %1400 = vmatprep.subr.bf16.mxu0 0
      %1401 = vmatpush1.bf16.msra.mxu0 0
      %1402 = vmatprep.subr.bf16.mxu0 0
      %1403 = vmatpush1.bf16.msra.mxu0 0
      %1404 = vmatprep.subr.bf16.mxu0 0
      %1405 = vmatpush1.bf16.msra.mxu0 0
      %1406 = vmatprep.subr.bf16.mxu0 0
      %1407 = vmatpush1.bf16.msra.mxu0 0
      %1408 = vmatprep.subr.bf16.mxu0 0
      %1409 = vmatpush1.bf16.msra.mxu0 0
      %1410 = vmatprep.subr.bf16.mxu0 0
      %1411 = vmatpush1.bf16.msra.mxu0 0
      %1412 = vmatprep.subr.bf16.mxu0 0
      %1413 = vmatpush1.bf16.msra.mxu0 0
      %1414 = vmatprep.subr.bf16.mxu0 0
      %1415 = vmatpush1.bf16.msra.mxu0 %v1398
      %1416 = vmatprep.subr.bf16.mxu0 0
      %1417 = vmatpush2.bf16.msra.mxu0 0
      %1418 = vmatprep.subr.bf16.mxu0 0
      %1419 = vmatpush2.bf16.msra.mxu0 0
      %1420 = vmatprep.subr.bf16.mxu0 0
      %1421 = vmatpush2.bf16.msra.mxu0 0
      %1422 = vmatprep.subr.bf16.mxu0 0
      %1423 = vmatpush2.bf16.msra.mxu0 0
      %1424 = vmatprep.subr.bf16.mxu0 0
      %1425 = vmatpush2.bf16.msra.mxu0 0
      %1426 = vmatprep.subr.bf16.mxu0 0
      %1427 = vmatpush2.bf16.msra.mxu0 0
      %1428 = vmatprep.subr.bf16.mxu0 0
      %1429 = vmatpush2.bf16.msra.mxu0 0
      %1430 = vmatprep.subr.bf16.mxu0 0
      %1431 = vmatpush2.bf16.msra.mxu0 0
      %1432 = vmatprep.mubr.bf16.mxu0 0
      %1433 = vmatmul.mubr.bf16.gmra.mxu0 %v631
      %v1434 = vpop.f32.mrf.mxu0
      %v1435 = vadd.f32 0.0, %v1434
      %v1436 = vpop.f32.mrf.mxu0
      %v1437 = vpop.f32.mrf.mxu0
      %v1438 = vadd.f32 0.0, %v1437
      %v1439 = vpop.f32.mrf.mxu0
      %1440 = vmatprep.mubr.bf16.mxu0 0
      %1441 = vmatmul.mubr.bf16.gmra.mxu0 %v634
      %v1442 = vpop.f32.mrf.mxu0
      %v1443 = vadd.f32 0.0, %v1442
      %v1444 = vpop.f32.mrf.mxu0
      %v1445 = vpop.f32.mrf.mxu0
      %v1446 = vadd.f32 0.0, %v1445
      %v1447 = vpop.f32.mrf.mxu0
      %1448 = vmatprep.mubr.bf16.mxu0 0
      %1449 = vmatmul.mubr.bf16.gmra.mxu0 %v637
      %v1450 = vpop.f32.mrf.mxu0
      %v1451 = vadd.f32 0.0, %v1450
      %v1452 = vpop.f32.mrf.mxu0
      %v1453 = vpop.f32.mrf.mxu0
      %v1454 = vadd.f32 0.0, %v1453
      %v1455 = vpop.f32.mrf.mxu0
      %1456 = vmatprep.mubr.bf16.mxu0 0
      %1457 = vmatmul.mubr.bf16.gmra.mxu0 %v640
      %v1458 = vpop.f32.mrf.mxu0
      %v1459 = vadd.f32 0.0, %v1458
      %v1460 = vpop.f32.mrf.mxu0
      %v1461 = vpop.f32.mrf.mxu0
      %v1462 = vadd.f32 0.0, %v1461
      %v1463 = vpop.f32.mrf.mxu0
      %1464 = vmatprep.mubr.bf16.mxu0 0
      %1465 = vmatmul.mubr.bf16.gmra.mxu0 %v643
      %v1466 = vpop.f32.mrf.mxu0
      %v1467 = vadd.f32 0.0, %v1466
      %v1468 = vpop.f32.mrf.mxu0
      %v1469 = vpop.f32.mrf.mxu0
      %v1470 = vadd.f32 0.0, %v1469
      %v1471 = vpop.f32.mrf.mxu0
      %1472 = vmatprep.mubr.bf16.mxu0 0
      %1473 = vmatmul.mubr.bf16.gmra.mxu0 %v646
      %v1474 = vpop.f32.mrf.mxu0
      %v1475 = vadd.f32 0.0, %v1474
      %v1476 = vpop.f32.mrf.mxu0
      %v1477 = vpop.f32.mrf.mxu0
      %v1478 = vadd.f32 0.0, %v1477
      %v1479 = vpop.f32.mrf.mxu0
      %1480 = vmatprep.mubr.bf16.mxu0 0
      %1481 = vmatmul.mubr.bf16.gmra.mxu0 %v989
      %v1482 = vpop.f32.mrf.mxu0
      %v1483 = vadd.f32 0.0, %v1482
      %v1484 = vpop.f32.mrf.mxu0
      %v1485 = vpop.f32.mrf.mxu0
      %v1486 = vadd.f32 0.0, %v1485
      %v1487 = vpop.f32.mrf.mxu0
      %1488 = vmatprep.mubr.bf16.mxu0 0
      %1489 = vmatmul.mubr.bf16.gmra.mxu0 %v1395
      %v1490 = vpop.f32.mrf.mxu0
      %v1491 = vadd.f32 0.0, %v1490
      %v1492 = vpop.f32.mrf.mxu0
      %v1493 = vpop.f32.mrf.mxu0
      %v1494 = vadd.f32 0.0, %v1493
      %v1495 = vpop.f32.mrf.mxu0
      %1496 = vdwg.mxu0
      %v1497 = vadd.f32 %v1371, %v1435
      %v1498 = vadd.f32 %v1372, %v1438
      %v1499 = vadd.f32 %v1373, %v1443
      %v1500 = vadd.f32 %v1374, %v1446
      %v1501 = vadd.f32 %v1375, %v1451
      %v1502 = vadd.f32 %v1376, %v1454
      %v1503 = vadd.f32 %v1377, %v1459
      %v1504 = vadd.f32 %v1378, %v1462
      %v1505 = vadd.f32 %v1379, %v1467
      %v1506 = vadd.f32 %v1380, %v1470
      %v1507 = vadd.f32 %v1381, %v1475
      %v1508 = vadd.f32 %v1382, %v1478
      %v1509 = vadd.f32 %v1383, %v1483
      %v1510 = vadd.f32 %v1384, %v1486
      %v1511 = vadd.f32 %v1385, %v1491
      %v1512 = vadd.f32 %v1386, %v1494
      %v1514 = vshrl.u32 %v233, 16
      %v1516 = vrot.slane %v1514, 4
      %v1517 = vshll.u32 %v233, 16
      %v1519 = vrot.slane %v1517, 5
      %v1520 = vor.u32 %v1516, %v1519
      %v1521 = vrot.slane %v1520, 4
      %v1523 = vshll.u32 %v234, 16
      %v1525 = vrot.slane %v1523, 5
      %v1526 = vsel %vm239, %v1521, %v1525
      %v1527 = vshrl.u32 %v234, 16
      %v1529 = vrot.slane %v1527, 4
      %v1530 = vor.u32 %v1529, %v1525
      %v1531 = vrot.slane %v1530, 4
      %v1533 = vshll.u32 %v235, 16
      %v1535 = vrot.slane %v1533, 5
      %v1536 = vsel %vm239, %v1531, %v1535
      %s1537 = scalar_lea.vmem %s1, 14
      %v1538 = vld [vmem:[%s1537] sm:$0x3]
      %v1539 = vunpack.c.l.b16 %v1526
      %v1540 = vunpack.c.l.b16 %v1536
      %v1541 = vpack.c.b16 %v1540, %v1539
      %v1543 = vsel %vm458, %v1541, 0
      %v1546 = vsel %vm483, %v1538, 0
      %1548 = vmatprep.subr.bf16.mxu0 0
      %1549 = vmatpush1.bf16.msra.mxu0 0
      %1550 = vmatprep.subr.bf16.mxu0 0
      %1551 = vmatpush1.bf16.msra.mxu0 0
      %1552 = vmatprep.subr.bf16.mxu0 0
      %1553 = vmatpush1.bf16.msra.mxu0 0
      %1554 = vmatprep.subr.bf16.mxu0 0
      %1555 = vmatpush1.bf16.msra.mxu0 0
      %1556 = vmatprep.subr.bf16.mxu0 0
      %1557 = vmatpush1.bf16.msra.mxu0 0
      %1558 = vmatprep.subr.bf16.mxu0 0
      %1559 = vmatpush1.bf16.msra.mxu0 0
      %1560 = vmatprep.subr.bf16.mxu0 0
      %1561 = vmatpush1.bf16.msra.mxu0 0
      %1562 = vmatprep.subr.bf16.mxu0 0
      %1563 = vmatpush1.bf16.msra.mxu0 %v1546
      %1564 = vmatprep.subr.bf16.mxu0 0
      %1565 = vmatpush2.bf16.msra.mxu0 0
      %1566 = vmatprep.subr.bf16.mxu0 0
      %1567 = vmatpush2.bf16.msra.mxu0 0
      %1568 = vmatprep.subr.bf16.mxu0 0
      %1569 = vmatpush2.bf16.msra.mxu0 0
      %1570 = vmatprep.subr.bf16.mxu0 0
      %1571 = vmatpush2.bf16.msra.mxu0 0
      %1572 = vmatprep.subr.bf16.mxu0 0
      %1573 = vmatpush2.bf16.msra.mxu0 0
      %1574 = vmatprep.subr.bf16.mxu0 0
      %1575 = vmatpush2.bf16.msra.mxu0 0
      %1576 = vmatprep.subr.bf16.mxu0 0
      %1577 = vmatpush2.bf16.msra.mxu0 0
      %1578 = vmatprep.subr.bf16.mxu0 0
      %1579 = vmatpush2.bf16.msra.mxu0 0
      %1580 = vmatprep.mubr.bf16.mxu0 0
      %1581 = vmatmul.mubr.bf16.gmra.mxu0 %v466
      %v1582 = vpop.f32.mrf.mxu0
      %v1583 = vadd.f32 0.0, %v1582
      %v1584 = vpop.f32.mrf.mxu0
      %v1585 = vpop.f32.mrf.mxu0
      %v1586 = vadd.f32 0.0, %v1585
      %v1587 = vpop.f32.mrf.mxu0
      %1588 = vmatprep.mubr.bf16.mxu0 0
      %1589 = vmatmul.mubr.bf16.gmra.mxu0 %v469
      %v1590 = vpop.f32.mrf.mxu0
      %v1591 = vadd.f32 0.0, %v1590
      %v1592 = vpop.f32.mrf.mxu0
      %v1593 = vpop.f32.mrf.mxu0
      %v1594 = vadd.f32 0.0, %v1593
      %v1595 = vpop.f32.mrf.mxu0
      %1596 = vmatprep.mubr.bf16.mxu0 0
      %1597 = vmatmul.mubr.bf16.gmra.mxu0 %v472
      %v1598 = vpop.f32.mrf.mxu0
      %v1599 = vadd.f32 0.0, %v1598
      %v1600 = vpop.f32.mrf.mxu0
      %v1601 = vpop.f32.mrf.mxu0
      %v1602 = vadd.f32 0.0, %v1601
      %v1603 = vpop.f32.mrf.mxu0
      %1604 = vmatprep.mubr.bf16.mxu0 0
      %1605 = vmatmul.mubr.bf16.gmra.mxu0 %v475
      %v1606 = vpop.f32.mrf.mxu0
      %v1607 = vadd.f32 0.0, %v1606
      %v1608 = vpop.f32.mrf.mxu0
      %v1609 = vpop.f32.mrf.mxu0
      %v1610 = vadd.f32 0.0, %v1609
      %v1611 = vpop.f32.mrf.mxu0
      %1612 = vmatprep.mubr.bf16.mxu0 0
      %1613 = vmatmul.mubr.bf16.gmra.mxu0 %v478
      %v1614 = vpop.f32.mrf.mxu0
      %v1615 = vadd.f32 0.0, %v1614
      %v1616 = vpop.f32.mrf.mxu0
      %v1617 = vpop.f32.mrf.mxu0
      %v1618 = vadd.f32 0.0, %v1617
      %v1619 = vpop.f32.mrf.mxu0
      %1620 = vmatprep.mubr.bf16.mxu0 0
      %1621 = vmatmul.mubr.bf16.gmra.mxu0 %v481
      %v1622 = vpop.f32.mrf.mxu0
      %v1623 = vadd.f32 0.0, %v1622
      %v1624 = vpop.f32.mrf.mxu0
      %v1625 = vpop.f32.mrf.mxu0
      %v1626 = vadd.f32 0.0, %v1625
      %v1627 = vpop.f32.mrf.mxu0
      %1628 = vmatprep.mubr.bf16.mxu0 0
      %1629 = vmatmul.mubr.bf16.gmra.mxu0 %v1137
      %v1630 = vpop.f32.mrf.mxu0
      %v1631 = vadd.f32 0.0, %v1630
      %v1632 = vpop.f32.mrf.mxu0
      %v1633 = vpop.f32.mrf.mxu0
      %v1634 = vadd.f32 0.0, %v1633
      %v1635 = vpop.f32.mrf.mxu0
      %1636 = vmatprep.mubr.bf16.mxu0 0
      %1637 = vmatmul.mubr.bf16.gmra.mxu0 %v1543
      %v1638 = vpop.f32.mrf.mxu0
      %v1639 = vadd.f32 0.0, %v1638
      %v1640 = vpop.f32.mrf.mxu0
      %v1641 = vpop.f32.mrf.mxu0
      %v1642 = vadd.f32 0.0, %v1641
      %v1643 = vpop.f32.mrf.mxu0
      %1644 = vdwg.mxu0
      %v1645 = vadd.f32 %v1497, %v1583
      %v1646 = vadd.f32 %v1498, %v1586
      %v1647 = vadd.f32 %v1499, %v1591
      %v1648 = vadd.f32 %v1500, %v1594
      %v1649 = vadd.f32 %v1501, %v1599
      %v1650 = vadd.f32 %v1502, %v1602
      %v1651 = vadd.f32 %v1503, %v1607
      %v1652 = vadd.f32 %v1504, %v1610
      %v1653 = vadd.f32 %v1505, %v1615
      %v1654 = vadd.f32 %v1506, %v1618
      %v1655 = vadd.f32 %v1507, %v1623
      %v1656 = vadd.f32 %v1508, %v1626
      %v1657 = vadd.f32 %v1509, %v1631
      %v1658 = vadd.f32 %v1510, %v1634
      %v1659 = vadd.f32 %v1511, %v1639
      %v1660 = vadd.f32 %v1512, %v1642
      %v1662 = vrot.slane %v233, 5
      %v1663 = vrot.slane %v1662, 4
      %v1664 = vrot.slane %v234, 5
      %v1665 = vsel %vm758, %v1663, %v1664
      %v1666 = vrot.slane %v1664, 4
      %v1667 = vrot.slane %v235, 5
      %v1668 = vsel %vm758, %v1666, %v1667
      %s1669 = scalar_lea.vmem %s1, 16
      %v1670 = vld [vmem:[%s1669] sm:$0x3]
      %v1671 = vunpack.c.l.b16 %v1665
      %v1672 = vunpack.c.l.b16 %v1668
      %v1673 = vpack.c.b16 %v1672, %v1671
      %v1675 = vsel %vm458, %v1673, 0
      %v1678 = vsel %vm483, %v1670, 0
      %1680 = vmatprep.subr.bf16.mxu0 0
      %1681 = vmatpush1.bf16.msra.mxu0 0
      %1682 = vmatprep.subr.bf16.mxu0 0
      %1683 = vmatpush1.bf16.msra.mxu0 0
      %1684 = vmatprep.subr.bf16.mxu0 0
      %1685 = vmatpush1.bf16.msra.mxu0 0
      %1686 = vmatprep.subr.bf16.mxu0 0
      %1687 = vmatpush1.bf16.msra.mxu0 0
      %1688 = vmatprep.subr.bf16.mxu0 0
      %1689 = vmatpush1.bf16.msra.mxu0 0
      %1690 = vmatprep.subr.bf16.mxu0 0
      %1691 = vmatpush1.bf16.msra.mxu0 0
      %1692 = vmatprep.subr.bf16.mxu0 0
      %1693 = vmatpush1.bf16.msra.mxu0 0
      %1694 = vmatprep.subr.bf16.mxu0 0
      %1695 = vmatpush1.bf16.msra.mxu0 %v1678
      %1696 = vmatprep.subr.bf16.mxu0 0
      %1697 = vmatpush2.bf16.msra.mxu0 0
      %1698 = vmatprep.subr.bf16.mxu0 0
      %1699 = vmatpush2.bf16.msra.mxu0 0
      %1700 = vmatprep.subr.bf16.mxu0 0
      %1701 = vmatpush2.bf16.msra.mxu0 0
      %1702 = vmatprep.subr.bf16.mxu0 0
      %1703 = vmatpush2.bf16.msra.mxu0 0
      %1704 = vmatprep.subr.bf16.mxu0 0
      %1705 = vmatpush2.bf16.msra.mxu0 0
      %1706 = vmatprep.subr.bf16.mxu0 0
      %1707 = vmatpush2.bf16.msra.mxu0 0
      %1708 = vmatprep.subr.bf16.mxu0 0
      %1709 = vmatpush2.bf16.msra.mxu0 0
      %1710 = vmatprep.subr.bf16.mxu0 0
      %1711 = vmatpush2.bf16.msra.mxu0 0
      %1712 = vmatprep.mubr.bf16.mxu0 0
      %1713 = vmatmul.mubr.bf16.gmra.mxu0 %v848
      %v1714 = vpop.f32.mrf.mxu0
      %v1715 = vadd.f32 0.0, %v1714
      %v1716 = vpop.f32.mrf.mxu0
      %v1717 = vpop.f32.mrf.mxu0
      %v1718 = vadd.f32 0.0, %v1717
      %v1719 = vpop.f32.mrf.mxu0
      %1720 = vmatprep.mubr.bf16.mxu0 0
      %1721 = vmatmul.mubr.bf16.gmra.mxu0 %v851
      %v1722 = vpop.f32.mrf.mxu0
      %v1723 = vadd.f32 0.0, %v1722
      %v1724 = vpop.f32.mrf.mxu0
      %v1725 = vpop.f32.mrf.mxu0
      %v1726 = vadd.f32 0.0, %v1725
      %v1727 = vpop.f32.mrf.mxu0
      %1728 = vmatprep.mubr.bf16.mxu0 0
      %1729 = vmatmul.mubr.bf16.gmra.mxu0 %v854
      %v1730 = vpop.f32.mrf.mxu0
      %v1731 = vadd.f32 0.0, %v1730
      %v1732 = vpop.f32.mrf.mxu0
      %v1733 = vpop.f32.mrf.mxu0
      %v1734 = vadd.f32 0.0, %v1733
      %v1735 = vpop.f32.mrf.mxu0
      %1736 = vmatprep.mubr.bf16.mxu0 0
      %1737 = vmatmul.mubr.bf16.gmra.mxu0 %v857
      %v1738 = vpop.f32.mrf.mxu0
      %v1739 = vadd.f32 0.0, %v1738
      %v1740 = vpop.f32.mrf.mxu0
      %v1741 = vpop.f32.mrf.mxu0
      %v1742 = vadd.f32 0.0, %v1741
      %v1743 = vpop.f32.mrf.mxu0
      %1744 = vmatprep.mubr.bf16.mxu0 0
      %1745 = vmatmul.mubr.bf16.gmra.mxu0 %v860
      %v1746 = vpop.f32.mrf.mxu0
      %v1747 = vadd.f32 0.0, %v1746
      %v1748 = vpop.f32.mrf.mxu0
      %v1749 = vpop.f32.mrf.mxu0
      %v1750 = vadd.f32 0.0, %v1749
      %v1751 = vpop.f32.mrf.mxu0
      %1752 = vmatprep.mubr.bf16.mxu0 0
      %1753 = vmatmul.mubr.bf16.gmra.mxu0 %v863
      %v1754 = vpop.f32.mrf.mxu0
      %v1755 = vadd.f32 0.0, %v1754
      %v1756 = vpop.f32.mrf.mxu0
      %v1757 = vpop.f32.mrf.mxu0
      %v1758 = vadd.f32 0.0, %v1757
      %v1759 = vpop.f32.mrf.mxu0
      %1760 = vmatprep.mubr.bf16.mxu0 0
      %1761 = vmatmul.mubr.bf16.gmra.mxu0 %v1269
      %v1762 = vpop.f32.mrf.mxu0
      %v1763 = vadd.f32 0.0, %v1762
      %v1764 = vpop.f32.mrf.mxu0
      %v1765 = vpop.f32.mrf.mxu0
      %v1766 = vadd.f32 0.0, %v1765
      %v1767 = vpop.f32.mrf.mxu0
      %1768 = vmatprep.mubr.bf16.mxu0 0
      %1769 = vmatmul.mubr.bf16.gmra.mxu0 %v1675
      %v1770 = vpop.f32.mrf.mxu0
      %v1771 = vadd.f32 0.0, %v1770
      %v1772 = vpop.f32.mrf.mxu0
      %v1773 = vpop.f32.mrf.mxu0
      %v1774 = vadd.f32 0.0, %v1773
      %v1775 = vpop.f32.mrf.mxu0
      %1776 = vdwg.mxu0
      %v1777 = vadd.f32 %v1645, %v1715
      %v1778 = vadd.f32 %v1646, %v1718
      %v1779 = vadd.f32 %v1647, %v1723
      %v1780 = vadd.f32 %v1648, %v1726
      %v1781 = vadd.f32 %v1649, %v1731
      %v1782 = vadd.f32 %v1650, %v1734
      %v1783 = vadd.f32 %v1651, %v1739
      %v1784 = vadd.f32 %v1652, %v1742
      %v1785 = vadd.f32 %v1653, %v1747
      %v1786 = vadd.f32 %v1654, %v1750
      %v1787 = vadd.f32 %v1655, %v1755
      %v1788 = vadd.f32 %v1656, %v1758
      %v1789 = vadd.f32 %v1657, %v1763
      %v1790 = vadd.f32 %v1658, %v1766
      %v1791 = vadd.f32 %v1659, %v1771
      %v1792 = vadd.f32 %v1660, %v1774
      %1793 = vxpose.xlu0.b32.start [1/16] %v1777, 128
      %1794 = vxpose.xlu0.b32.cont [2/16] %v1778, 128
      %1795 = vxpose.xlu0.b32.cont [3/16] %v1779, 128
      %1796 = vxpose.xlu0.b32.cont [4/16] %v1780, 128
      %1797 = vxpose.xlu0.b32.cont [5/16] %v1781, 128
      %1798 = vxpose.xlu0.b32.cont [6/16] %v1782, 128
      %1799 = vxpose.xlu0.b32.cont [7/16] %v1783, 128
      %1800 = vxpose.xlu0.b32.cont [8/16] %v1784, 128
      %1801 = vxpose.xlu0.b32.cont [9/16] %v1785, 128
      %1802 = vxpose.xlu0.b32.cont [10/16] %v1786, 128
      %1803 = vxpose.xlu0.b32.cont [11/16] %v1787, 128
      %1804 = vxpose.xlu0.b32.cont [12/16] %v1788, 128
      %1805 = vxpose.xlu0.b32.cont [13/16] %v1789, 128
      %1806 = vxpose.xlu0.b32.cont [14/16] %v1790, 128
      %1807 = vxpose.xlu0.b32.cont [15/16] %v1791, 128
      %1808 = vxpose.xlu0.b32.end [16/16] %v1792, 128
      %v1809 = vpop.trf.xlu0
      %v1810 = vpop.trf.xlu0
      %v1811 = vpop.trf.xlu0
      %v1812 = vpop.trf.xlu0
      %v1813 = vpop.trf.xlu0
      %v1814 = vpop.trf.xlu0
      %v1815 = vpop.trf.xlu0
      %v1816 = vpop.trf.xlu0
      %v1817 = vpop.trf.xlu0
      %v1818 = vpop.trf.xlu0
      %v1819 = vpop.trf.xlu0
      %v1820 = vpop.trf.xlu0
      %v1821 = vpop.trf.xlu0
      %v1822 = vpop.trf.xlu0
      %v1823 = vpop.trf.xlu0
      %v1824 = vpop.trf.xlu0
      %v1825 = vld [vmem:[%s2] sm:$0xff]
      %1827 = vset.pattern.permute.xlu0 0
      %1828 = vperm.xlu0 %1827, %v1825
      %v1829 = vpop.permute.xlu0 %1828
      %v1831 = vadd.f32 %v1809, %v1829
      %v1832 = vmax.f32 %v1831, 0.0
      %v1833 = vmin.f32 %v1832, 1.0
      %v1834 = vsub.f32 4.0, %v1833
      %1835 = vst [vmem:[%s204] sm:$0xff] %v1834
      %p1836 = scmp.lt.s32.totalorder %s18, 1
      %s1837 = scalar_select %p1836, %s18, 1
      %p1838 = scmp.lt.s32.totalorder %s19, 1
      %s1839 = scalar_select %p1838, %s19, 1
      %s1840 = smul.addr %s1837, 2
      %s1841 = sadd.s32 %s1839, %s1840
      %s1842 = smul.addr %s1841, 8
      %s1843 = scalar_lea.vmem %s3, %s1842
      // Predicated region
      $region33: #{spiking_conv2d_htanh.1} parent=31 // pred_check
        %p1844 = pneg %p116
      $region34: #{spiking_conv2d_htanh.1} parent=31 // pred_check_branch
        %1846 = sbr.rel (%p1844) target = $region36
      $region35: #{spiking_conv2d_htanh.1} parent=31 // pred_region
        _
      $region36: #{spiking_conv2d_htanh.1} parent=31 // pred_fallthru
        _
    $region32: #{spiking_conv2d_htanh.1} parent=5 // pred_fallthru
      _
    %p1847 = scmp.le.s32.totalorder 2, %s9
    // Predicated region
    $region37: #{spiking_conv2d_htanh.1} parent=5 // pred_check
      %p1848 = pneg %p1847
    $region38: #{spiking_conv2d_htanh.1} parent=5 // pred_check_branch
      %1850 = sbr.rel (%p1848) target = $region40
    $region39: #{spiking_conv2d_htanh.1} parent=5 // pred_region
      %s1851 = ssub.s32 %s9, 2
      // Predicated region
      $region41: #{spiking_conv2d_htanh.1} parent=39 // pred_check
        %p1852 = pneg %p122
      $region42: #{spiking_conv2d_htanh.1} parent=39 // pred_check_branch
        %1854 = sbr.rel (%p1852) target = $region44
      $region43: #{spiking_conv2d_htanh.1} parent=39 // pred_region
        %p1855 = scmp.lt.s32.totalorder %s20, 1
        %s1856 = scalar_select %p1855, %s20, 1
        %p1857 = scmp.lt.s32.totalorder %s21, 1
        %s1858 = scalar_select %p1857, %s21, 1
        %s1859 = smul.addr %s1856, 2
        %s1860 = sadd.s32 %s1858, %s1859
        %s1861 = smul.addr %s1860, 8
        %s1862 = scalar_lea.vmem %s3, %s1861
      $region44: #{spiking_conv2d_htanh.1} parent=39 // pred_fallthru
        _
    $region40: #{spiking_conv2d_htanh.1} parent=5 // pred_fallthru
      _
  $region6: #{spiking_conv2d_htanh.1} parent=0 // loop_footer
    %s13 = sadd.s32 1, %s9
  $region7: #{spiking_conv2d_htanh.1} parent=0 // loop_footer_branch
    %8 = sbr.rel target = $region3
  $region8: #{spiking_conv2d_htanh.1} parent=0 // loop_exit
    _

</llo_original>
